<compile_context>
chip_gen: v7x
topology: tpu7x:2x2x1
jax: 0.10.0
libtpu: 0.0.40
codegen_flags: <defaults>
</compile_context>

<pallas_src>
import jax
import jax.numpy as jnp
from jax.experimental import pallas as pl
from jax.experimental.pallas import tpu as pltpu

# ----------------------------- configuration --------------------------------
D = 8                    # number of hidden layers
W = 64                   # hidden width
SKIPS = (4,)             # skip-connection layers (concat features)
N_LEVELS = 4             # hash-grid levels
F_PER_LEVEL = 4          # features per level
INPUT_CH = N_LEVELS * F_PER_LEVEL   # hash_encoder.n_features
TABLE_SIZE = 2 ** 14     # hashmap entries per level
BASE_RES = 4             # coarsest grid resolution
MAX_BM = 512             # preferred batch tile (sublane-aligned, VMEM is tiny here)


# ------------------------- hash-grid encoder (glue) --------------------------
def hash_encode(x, tables):
    """x: (N, 3) in [0, 1);  tables: (L, T, F).  Returns (N, L*F) float32."""
    primes = jnp.array([1, 2654435761, 805459861], dtype=jnp.uint32)
    feats = []
    for lvl in range(N_LEVELS):
        res = BASE_RES * (2 ** lvl)
        xs = x * res
        x0 = jnp.floor(xs).astype(jnp.int32)
        frac = xs - x0.astype(x.dtype)
        level_feat = jnp.zeros((x.shape[0], F_PER_LEVEL), dtype=jnp.float32)
        for corner in range(8):
            offs = jnp.array([(corner >> 0) & 1, (corner >> 1) & 1,
                              (corner >> 2) & 1], dtype=jnp.int32)
            c = (x0 + offs).astype(jnp.uint32)
            idx = (c[:, 0] * primes[0]) ^ (c[:, 1] * primes[1]) ^ (c[:, 2] * primes[2])
            idx = (idx & jnp.uint32(TABLE_SIZE - 1)).astype(jnp.int32)
            w_corner = jnp.prod(
                jnp.where(offs[None, :] == 1, frac, 1.0 - frac), axis=-1)
            level_feat = level_feat + tables[lvl][idx] * w_corner[:, None]
        feats.append(level_feat)
    return jnp.concatenate(feats, axis=-1)


# ------------------------------ Pallas kernel --------------------------------
def sdf_mlp_kernel(feat_ref, *args):
    """args = [per-layer params ...], out_ref.

    Per-layer params: non-skip layer -> (w_bf16, b_f32);
                      skip layer     -> (w_feat_bf16, w_hidden_bf16, b_f32);
                      output layer   -> (wo_row_f32 (1,W), bo_f32 (1,1)).
    """
    out_ref = args[-1]
    params = args[:-1]

    feats = feat_ref[...]                              # (BM, INPUT_CH) bf16
    h = feats
    p = 0
    for i in range(D):
        if i in SKIPS:
            w_f = params[p][...]                       # (INPUT_CH, W) bf16
            w_h = params[p + 1][...]                   # (W, W)        bf16
            b = params[p + 2][...]                     # (1, W)        f32
            p += 3
            # torch.cat([features, h], -1) @ W == feats @ W[:C] + h @ W[C:]
            pre = (jnp.dot(feats, w_f, preferred_element_type=jnp.float32)
                   + jnp.dot(h, w_h, preferred_element_type=jnp.float32)
                   + b)
        else:
            w = params[p][...]                         # (in, W) bf16
            b = params[p + 1][...]                     # (1, W)  f32
            p += 2
            pre = jnp.dot(h, w, preferred_element_type=jnp.float32) + b
        # ReLU in f32 (v5e VPU has no bf16), then back to bf16 for the next MXU pass.
        h = jnp.maximum(pre, 0.0).astype(jnp.bfloat16)

    # Output layer: 1-wide matmul is a waste of an MXU drain -> VPU mul + lane reduce.
    wo = params[p][...]                                # (1, W) f32
    bo = params[p + 1][...]                            # (1, 1) f32
    sdf = jnp.sum(h.astype(jnp.float32) * wo, axis=-1, keepdims=True) + bo
    out_ref[...] = sdf.astype(out_ref.dtype)


def _choose_bm(n):
    """Prefer 512-row tiles; shrink so the grid keeps >= 2 tiles (v7x megacore)."""
    bm = MAX_BM
    while bm > 128 and pl.cdiv(n, bm) < 2:
        bm //= 2
    return bm


def sdf_mlp_pallas(features, params):
    """features: (N, INPUT_CH) f32;  params: flat f32 list [w0,b0,...,w8,b8]."""
    n = features.shape[0]
    bm = _choose_bm(n)
    num_tiles = pl.cdiv(n, bm)
    n_pad = num_tiles * bm

    feats = features.astype(jnp.bfloat16)              # halve the dominant HBM stream
    if n_pad != n:
        feats = jnp.pad(feats, ((0, n_pad - n), (0, 0)))

    # Build kernel-side params: bf16 hidden weights (skip layer pre-split),
    # f32 biases, output layer as an f32 (1, W) row + (1, 1) bias for the VPU path.
    kparams = []
    for i in range(D):
        w = params[2 * i]
        b = params[2 * i + 1].astype(jnp.float32)
        if i in SKIPS:
            kparams += [w[:INPUT_CH, :].astype(jnp.bfloat16),
                        w[INPUT_CH:, :].astype(jnp.bfloat16),
                        b]
        else:
            kparams += [w.astype(jnp.bfloat16), b]
    kparams.append(params[2 * D].reshape(1, W).astype(jnp.float32))   # (W,1)->(1,W)
    kparams.append(params[2 * D + 1].reshape(1, 1).astype(jnp.float32))

    in_specs = [pl.BlockSpec((bm, INPUT_CH), lambda i: (i, 0))]
    for pa in kparams:
        # bind rank explicitly (avoid late-binding closure bug)
        in_specs.append(pl.BlockSpec(pa.shape, lambda i, r=pa.ndim: (0,) * r))

    out = pl.pallas_call(
        sdf_mlp_kernel,
        out_shape=jax.ShapeDtypeStruct((n_pad, 1), jnp.float32),
        grid_spec=pltpu.PrefetchScalarGridSpec(
            num_scalar_prefetch=0,
            grid=(num_tiles,),
            in_specs=in_specs,
            out_specs=pl.BlockSpec((bm, 1), lambda i: (i, 0)),
            scratch_shapes=[],
        ),
        compiler_params=pltpu.CompilerParams(
            dimension_semantics=("parallel",)),
    )(feats, *kparams)
    return out[:n]


# --------------------------- parameter construction --------------------------
def init_params(key):
    """Deterministic PyTorch-Linear-style init; weights stored as (in, out), f32."""
    dims_in = []
    for i in range(D):
        if i == 0:
            dims_in.append(INPUT_CH)
        elif i in SKIPS:
            dims_in.append(W + INPUT_CH)
        else:
            dims_in.append(W)
    dims_in.append(W)          # output layer
    dims_out = [W] * D + [1]

    params = []
    for fan_in, fan_out in zip(dims_in, dims_out):
        key, kw, kb = jax.random.split(key, 3)
        bound = 1.0 / jnp.sqrt(fan_in)
        w = jax.random.uniform(kw, (fan_in, fan_out), jnp.float32, -bound, bound)
        b = jax.random.uniform(kb, (1, fan_out), jnp.float32, -bound, bound)
        params += [w, b]
    return params


# ------------------------------- JAX reference -------------------------------
def sdf_mlp_reference(features, params):
    h = features
    for i in range(D):
        w = params[2 * i]
        b = params[2 * i + 1]
        if i in SKIPS:
            h = jnp.concatenate([features, h], axis=-1)
        h = jnp.maximum(h @ w + b, 0.0)
    return h @ params[2 * D] + params[2 * D + 1]


# ----------------------------------- main ------------------------------------
if __name__ == "__main__":
    key = jax.random.PRNGKey(0)
    key, k_pts, k_tab, k_par = jax.random.split(key, 4)

    n_points = 256
    x = jax.random.uniform(k_pts, (n_points, 3), jnp.float32)        # 3D coords in [0,1)
    hash_tables = 1e-2 * jax.random.normal(
        k_tab, (N_LEVELS, TABLE_SIZE, F_PER_LEVEL), jnp.float32)
    params = init_params(k_par)

    features = hash_encode(x, hash_tables)                           # (N, 16) f32

    sdf = sdf_mlp_pallas(features, params)                           # (N, 1)
    sdf = jax.block_until_ready(sdf)

    ref = sdf_mlp_reference(features, params)
    assert sdf.shape == (n_points, 1)
    # bf16 MXU operands vs f32 reference -> looser tolerance
    assert jnp.allclose(sdf, ref, atol=5e-2, rtol=5e-2), "mismatch vs f32 reference"

    print("KERNEL_OK")
</pallas_src>

<mosaic_0001>
module attributes {stable_mosaic.version = 11 : i64} {
  func.func @sdf_mlp_kernel(%arg0: i32, %arg1: memref<128x16xbf16, #tpu.memory_space<vmem>>, %arg2: memref<16x64xbf16, #tpu.memory_space<vmem>>, %arg3: memref<1x64xf32, #tpu.memory_space<vmem>>, %arg4: memref<64x64xbf16, #tpu.memory_space<vmem>>, %arg5: memref<1x64xf32, #tpu.memory_space<vmem>>, %arg6: memref<64x64xbf16, #tpu.memory_space<vmem>>, %arg7: memref<1x64xf32, #tpu.memory_space<vmem>>, %arg8: memref<64x64xbf16, #tpu.memory_space<vmem>>, %arg9: memref<1x64xf32, #tpu.memory_space<vmem>>, %arg10: memref<16x64xbf16, #tpu.memory_space<vmem>>, %arg11: memref<64x64xbf16, #tpu.memory_space<vmem>>, %arg12: memref<1x64xf32, #tpu.memory_space<vmem>>, %arg13: memref<64x64xbf16, #tpu.memory_space<vmem>>, %arg14: memref<1x64xf32, #tpu.memory_space<vmem>>, %arg15: memref<64x64xbf16, #tpu.memory_space<vmem>>, %arg16: memref<1x64xf32, #tpu.memory_space<vmem>>, %arg17: memref<64x64xbf16, #tpu.memory_space<vmem>>, %arg18: memref<1x64xf32, #tpu.memory_space<vmem>>, %arg19: memref<1x64xf32, #tpu.memory_space<vmem>>, %arg20: memref<1x1xf32, #tpu.memory_space<vmem>>, %arg21: memref<128x1xf32, #tpu.memory_space<vmem>>) attributes {dimension_semantics = [#tpu.dimension_semantics<parallel>], iteration_bounds = array<i64: 2>, scalar_prefetch = 0 : i64, scratch_operands = 0 : i64, tpu.core_type = #tpu.core_type<tc>, window_params = [{transform_indices = @transform_0, window_bounds = array<i64: 128, 16>}, {pipeline_mode = #tpu.pipeline_mode<synchronous>, transform_indices = @transform_1, window_bounds = array<i64: 16, 64>}, {pipeline_mode = #tpu.pipeline_mode<synchronous>, transform_indices = @transform_2, window_bounds = array<i64: 1, 64>}, {pipeline_mode = #tpu.pipeline_mode<synchronous>, transform_indices = @transform_3, window_bounds = array<i64: 64, 64>}, {pipeline_mode = #tpu.pipeline_mode<synchronous>, transform_indices = @transform_4, window_bounds = array<i64: 1, 64>}, {pipeline_mode = #tpu.pipeline_mode<synchronous>, transform_indices = @transform_5, window_bounds = array<i64: 64, 64>}, {pipeline_mode = #tpu.pipeline_mode<synchronous>, transform_indices = @transform_6, window_bounds = array<i64: 1, 64>}, {pipeline_mode = #tpu.pipeline_mode<synchronous>, transform_indices = @transform_7, window_bounds = array<i64: 64, 64>}, {pipeline_mode = #tpu.pipeline_mode<synchronous>, transform_indices = @transform_8, window_bounds = array<i64: 1, 64>}, {pipeline_mode = #tpu.pipeline_mode<synchronous>, transform_indices = @transform_9, window_bounds = array<i64: 16, 64>}, {pipeline_mode = #tpu.pipeline_mode<synchronous>, transform_indices = @transform_10, window_bounds = array<i64: 64, 64>}, {pipeline_mode = #tpu.pipeline_mode<synchronous>, transform_indices = @transform_11, window_bounds = array<i64: 1, 64>}, {pipeline_mode = #tpu.pipeline_mode<synchronous>, transform_indices = @transform_12, window_bounds = array<i64: 64, 64>}, {pipeline_mode = #tpu.pipeline_mode<synchronous>, transform_indices = @transform_13, window_bounds = array<i64: 1, 64>}, {pipeline_mode = #tpu.pipeline_mode<synchronous>, transform_indices = @transform_14, window_bounds = array<i64: 64, 64>}, {pipeline_mode = #tpu.pipeline_mode<synchronous>, transform_indices = @transform_15, window_bounds = array<i64: 1, 64>}, {pipeline_mode = #tpu.pipeline_mode<synchronous>, transform_indices = @transform_16, window_bounds = array<i64: 64, 64>}, {pipeline_mode = #tpu.pipeline_mode<synchronous>, transform_indices = @transform_17, window_bounds = array<i64: 1, 64>}, {pipeline_mode = #tpu.pipeline_mode<synchronous>, transform_indices = @transform_18, window_bounds = array<i64: 1, 64>}, {pipeline_mode = #tpu.pipeline_mode<synchronous>, transform_indices = @transform_19, window_bounds = array<i64: 1, 1>}, {transform_indices = @transform_20, window_bounds = array<i64: 128, 1>}]} {
    %c0 = arith.constant 0 : index
    %c0_0 = arith.constant 0 : index
    %0 = vector.load %arg1[%c0, %c0_0] : memref<128x16xbf16, #tpu.memory_space<vmem>>, vector<128x16xbf16>
    %c0_1 = arith.constant 0 : index
    %c0_2 = arith.constant 0 : index
    %1 = vector.load %arg2[%c0_1, %c0_2] : memref<16x64xbf16, #tpu.memory_space<vmem>>, vector<16x64xbf16>
    %c0_3 = arith.constant 0 : index
    %c0_4 = arith.constant 0 : index
    %2 = vector.load %arg3[%c0_3, %c0_4] : memref<1x64xf32, #tpu.memory_space<vmem>>, vector<1x64xf32>
    %cst = arith.constant dense<0.000000e+00> : vector<128x64xf32>
    %3 = tpu.matmul %0, %1, %cst {dimension_numbers = #tpu.dot_dimension_numbers<[1], [0], [0], [1], [0, 0, 1, 1], [], []>} : vector<128x16xbf16>, vector<16x64xbf16>, vector<128x64xf32> -> vector<128x64xf32>
    %4 = vector.broadcast %2 : vector<1x64xf32> to vector<128x64xf32>
    %5 = arith.addf %3, %4 : vector<128x64xf32>
    %cst_5 = arith.constant 0.000000e+00 : f32
    %6 = vector.broadcast %cst_5 : f32 to vector<128x64xf32>
    %7 = arith.maximumf %5, %6 : vector<128x64xf32>
    %8 = arith.truncf %7 : vector<128x64xf32> to vector<128x64xbf16>
    %c0_6 = arith.constant 0 : index
    %c0_7 = arith.constant 0 : index
    %9 = vector.load %arg4[%c0_6, %c0_7] : memref<64x64xbf16, #tpu.memory_space<vmem>>, vector<64x64xbf16>
    %c0_8 = arith.constant 0 : index
    %c0_9 = arith.constant 0 : index
    %10 = vector.load %arg5[%c0_8, %c0_9] : memref<1x64xf32, #tpu.memory_space<vmem>>, vector<1x64xf32>
    %cst_10 = arith.constant dense<0.000000e+00> : vector<128x64xf32>
    %11 = tpu.matmul %8, %9, %cst_10 {dimension_numbers = #tpu.dot_dimension_numbers<[1], [0], [0], [1], [0, 0, 1, 1], [], []>} : vector<128x64xbf16>, vector<64x64xbf16>, vector<128x64xf32> -> vector<128x64xf32>
    %12 = vector.broadcast %10 : vector<1x64xf32> to vector<128x64xf32>
    %13 = arith.addf %11, %12 : vector<128x64xf32>
    %cst_11 = arith.constant 0.000000e+00 : f32
    %14 = vector.broadcast %cst_11 : f32 to vector<128x64xf32>
    %15 = arith.maximumf %13, %14 : vector<128x64xf32>
    %16 = arith.truncf %15 : vector<128x64xf32> to vector<128x64xbf16>
    %c0_12 = arith.constant 0 : index
    %c0_13 = arith.constant 0 : index
    %17 = vector.load %arg6[%c0_12, %c0_13] : memref<64x64xbf16, #tpu.memory_space<vmem>>, vector<64x64xbf16>
    %c0_14 = arith.constant 0 : index
    %c0_15 = arith.constant 0 : index
    %18 = vector.load %arg7[%c0_14, %c0_15] : memref<1x64xf32, #tpu.memory_space<vmem>>, vector<1x64xf32>
    %cst_16 = arith.constant dense<0.000000e+00> : vector<128x64xf32>
    %19 = tpu.matmul %16, %17, %cst_16 {dimension_numbers = #tpu.dot_dimension_numbers<[1], [0], [0], [1], [0, 0, 1, 1], [], []>} : vector<128x64xbf16>, vector<64x64xbf16>, vector<128x64xf32> -> vector<128x64xf32>
    %20 = vector.broadcast %18 : vector<1x64xf32> to vector<128x64xf32>
    %21 = arith.addf %19, %20 : vector<128x64xf32>
    %cst_17 = arith.constant 0.000000e+00 : f32
    %22 = vector.broadcast %cst_17 : f32 to vector<128x64xf32>
    %23 = arith.maximumf %21, %22 : vector<128x64xf32>
    %24 = arith.truncf %23 : vector<128x64xf32> to vector<128x64xbf16>
    %c0_18 = arith.constant 0 : index
    %c0_19 = arith.constant 0 : index
    %25 = vector.load %arg8[%c0_18, %c0_19] : memref<64x64xbf16, #tpu.memory_space<vmem>>, vector<64x64xbf16>
    %c0_20 = arith.constant 0 : index
    %c0_21 = arith.constant 0 : index
    %26 = vector.load %arg9[%c0_20, %c0_21] : memref<1x64xf32, #tpu.memory_space<vmem>>, vector<1x64xf32>
    %cst_22 = arith.constant dense<0.000000e+00> : vector<128x64xf32>
    %27 = tpu.matmul %24, %25, %cst_22 {dimension_numbers = #tpu.dot_dimension_numbers<[1], [0], [0], [1], [0, 0, 1, 1], [], []>} : vector<128x64xbf16>, vector<64x64xbf16>, vector<128x64xf32> -> vector<128x64xf32>
    %28 = vector.broadcast %26 : vector<1x64xf32> to vector<128x64xf32>
    %29 = arith.addf %27, %28 : vector<128x64xf32>
    %cst_23 = arith.constant 0.000000e+00 : f32
    %30 = vector.broadcast %cst_23 : f32 to vector<128x64xf32>
    %31 = arith.maximumf %29, %30 : vector<128x64xf32>
    %32 = arith.truncf %31 : vector<128x64xf32> to vector<128x64xbf16>
    %c0_24 = arith.constant 0 : index
    %c0_25 = arith.constant 0 : index
    %33 = vector.load %arg10[%c0_24, %c0_25] : memref<16x64xbf16, #tpu.memory_space<vmem>>, vector<16x64xbf16>
    %c0_26 = arith.constant 0 : index
    %c0_27 = arith.constant 0 : index
    %34 = vector.load %arg11[%c0_26, %c0_27] : memref<64x64xbf16, #tpu.memory_space<vmem>>, vector<64x64xbf16>
    %c0_28 = arith.constant 0 : index
    %c0_29 = arith.constant 0 : index
    %35 = vector.load %arg12[%c0_28, %c0_29] : memref<1x64xf32, #tpu.memory_space<vmem>>, vector<1x64xf32>
    %cst_30 = arith.constant dense<0.000000e+00> : vector<128x64xf32>
    %36 = tpu.matmul %0, %33, %cst_30 {dimension_numbers = #tpu.dot_dimension_numbers<[1], [0], [0], [1], [0, 0, 1, 1], [], []>} : vector<128x16xbf16>, vector<16x64xbf16>, vector<128x64xf32> -> vector<128x64xf32>
    %cst_31 = arith.constant dense<0.000000e+00> : vector<128x64xf32>
    %37 = tpu.matmul %32, %34, %cst_31 {dimension_numbers = #tpu.dot_dimension_numbers<[1], [0], [0], [1], [0, 0, 1, 1], [], []>} : vector<128x64xbf16>, vector<64x64xbf16>, vector<128x64xf32> -> vector<128x64xf32>
    %38 = arith.addf %36, %37 : vector<128x64xf32>
    %39 = vector.broadcast %35 : vector<1x64xf32> to vector<128x64xf32>
    %40 = arith.addf %38, %39 : vector<128x64xf32>
    %cst_32 = arith.constant 0.000000e+00 : f32
    %41 = vector.broadcast %cst_32 : f32 to vector<128x64xf32>
    %42 = arith.maximumf %40, %41 : vector<128x64xf32>
    %43 = arith.truncf %42 : vector<128x64xf32> to vector<128x64xbf16>
    %c0_33 = arith.constant 0 : index
    %c0_34 = arith.constant 0 : index
    %44 = vector.load %arg13[%c0_33, %c0_34] : memref<64x64xbf16, #tpu.memory_space<vmem>>, vector<64x64xbf16>
    %c0_35 = arith.constant 0 : index
    %c0_36 = arith.constant 0 : index
    %45 = vector.load %arg14[%c0_35, %c0_36] : memref<1x64xf32, #tpu.memory_space<vmem>>, vector<1x64xf32>
    %cst_37 = arith.constant dense<0.000000e+00> : vector<128x64xf32>
    %46 = tpu.matmul %43, %44, %cst_37 {dimension_numbers = #tpu.dot_dimension_numbers<[1], [0], [0], [1], [0, 0, 1, 1], [], []>} : vector<128x64xbf16>, vector<64x64xbf16>, vector<128x64xf32> -> vector<128x64xf32>
    %47 = vector.broadcast %45 : vector<1x64xf32> to vector<128x64xf32>
    %48 = arith.addf %46, %47 : vector<128x64xf32>
    %cst_38 = arith.constant 0.000000e+00 : f32
    %49 = vector.broadcast %cst_38 : f32 to vector<128x64xf32>
    %50 = arith.maximumf %48, %49 : vector<128x64xf32>
    %51 = arith.truncf %50 : vector<128x64xf32> to vector<128x64xbf16>
    %c0_39 = arith.constant 0 : index
    %c0_40 = arith.constant 0 : index
    %52 = vector.load %arg15[%c0_39, %c0_40] : memref<64x64xbf16, #tpu.memory_space<vmem>>, vector<64x64xbf16>
    %c0_41 = arith.constant 0 : index
    %c0_42 = arith.constant 0 : index
    %53 = vector.load %arg16[%c0_41, %c0_42] : memref<1x64xf32, #tpu.memory_space<vmem>>, vector<1x64xf32>
    %cst_43 = arith.constant dense<0.000000e+00> : vector<128x64xf32>
    %54 = tpu.matmul %51, %52, %cst_43 {dimension_numbers = #tpu.dot_dimension_numbers<[1], [0], [0], [1], [0, 0, 1, 1], [], []>} : vector<128x64xbf16>, vector<64x64xbf16>, vector<128x64xf32> -> vector<128x64xf32>
    %55 = vector.broadcast %53 : vector<1x64xf32> to vector<128x64xf32>
    %56 = arith.addf %54, %55 : vector<128x64xf32>
    %cst_44 = arith.constant 0.000000e+00 : f32
    %57 = vector.broadcast %cst_44 : f32 to vector<128x64xf32>
    %58 = arith.maximumf %56, %57 : vector<128x64xf32>
    %59 = arith.truncf %58 : vector<128x64xf32> to vector<128x64xbf16>
    %c0_45 = arith.constant 0 : index
    %c0_46 = arith.constant 0 : index
    %60 = vector.load %arg17[%c0_45, %c0_46] : memref<64x64xbf16, #tpu.memory_space<vmem>>, vector<64x64xbf16>
    %c0_47 = arith.constant 0 : index
    %c0_48 = arith.constant 0 : index
    %61 = vector.load %arg18[%c0_47, %c0_48] : memref<1x64xf32, #tpu.memory_space<vmem>>, vector<1x64xf32>
    %cst_49 = arith.constant dense<0.000000e+00> : vector<128x64xf32>
    %62 = tpu.matmul %59, %60, %cst_49 {dimension_numbers = #tpu.dot_dimension_numbers<[1], [0], [0], [1], [0, 0, 1, 1], [], []>} : vector<128x64xbf16>, vector<64x64xbf16>, vector<128x64xf32> -> vector<128x64xf32>
    %63 = vector.broadcast %61 : vector<1x64xf32> to vector<128x64xf32>
    %64 = arith.addf %62, %63 : vector<128x64xf32>
    %cst_50 = arith.constant 0.000000e+00 : f32
    %65 = vector.broadcast %cst_50 : f32 to vector<128x64xf32>
    %66 = arith.maximumf %64, %65 : vector<128x64xf32>
    %67 = arith.truncf %66 : vector<128x64xf32> to vector<128x64xbf16>
    %c0_51 = arith.constant 0 : index
    %c0_52 = arith.constant 0 : index
    %68 = vector.load %arg19[%c0_51, %c0_52] : memref<1x64xf32, #tpu.memory_space<vmem>>, vector<1x64xf32>
    %c0_53 = arith.constant 0 : index
    %c0_54 = arith.constant 0 : index
    %69 = vector.load %arg20[%c0_53, %c0_54] : memref<1x1xf32, #tpu.memory_space<vmem>>, vector<1x1xf32>
    %70 = arith.extf %67 : vector<128x64xbf16> to vector<128x64xf32>
    %71 = vector.broadcast %68 : vector<1x64xf32> to vector<128x64xf32>
    %72 = arith.mulf %70, %71 : vector<128x64xf32>
    %cst_55 = arith.constant dense<0.000000e+00> : vector<128xf32>
    %73 = vector.multi_reduction <add>, %72, %cst_55 [1] : vector<128x64xf32> to vector<128xf32>
    %74 = vector.shape_cast %73 : vector<128xf32> to vector<128x1xf32>
    %75 = vector.broadcast %69 : vector<1x1xf32> to vector<128x1xf32>
    %76 = arith.addf %74, %75 : vector<128x1xf32>
    %c0_56 = arith.constant 0 : index
    %c0_57 = arith.constant 0 : index
    %77 = vector.load %arg21[%c0_56, %c0_57] : memref<128x1xf32, #tpu.memory_space<vmem>>, vector<128x1xf32>
    tpu.vector_store %arg21[%c0_56, %c0_57], %76 {strides = array<i32>} : memref<128x1xf32, #tpu.memory_space<vmem>>, vector<128x1xf32>,
    return
  }
  func.func @transform_0(%arg0: i32) -> (i32, i32) {
    %c0_i32 = arith.constant 0 : i32
    %c0_i32_0 = arith.constant 0 : i32
    return %arg0, %c0_i32 : i32, i32
  }
  func.func @transform_1(%arg0: i32) -> (i32, i32) {
    %c0_i32 = arith.constant 0 : i32
    %c0_i32_0 = arith.constant 0 : i32
    %c0_i32_1 = arith.constant 0 : i32
    return %c0_i32, %c0_i32_0 : i32, i32
  }
  func.func @transform_2(%arg0: i32) -> (i32, i32) {
    %c0_i32 = arith.constant 0 : i32
    %c0_i32_0 = arith.constant 0 : i32
    %c0_i32_1 = arith.constant 0 : i32
    return %c0_i32, %c0_i32_0 : i32, i32
  }
  func.func @transform_3(%arg0: i32) -> (i32, i32) {
    %c0_i32 = arith.constant 0 : i32
    %c0_i32_0 = arith.constant 0 : i32
    %c0_i32_1 = arith.constant 0 : i32
    return %c0_i32, %c0_i32_0 : i32, i32
  }
  func.func @transform_4(%arg0: i32) -> (i32, i32) {
    %c0_i32 = arith.constant 0 : i32
    %c0_i32_0 = arith.constant 0 : i32
    %c0_i32_1 = arith.constant 0 : i32
    return %c0_i32, %c0_i32_0 : i32, i32
  }
  func.func @transform_5(%arg0: i32) -> (i32, i32) {
    %c0_i32 = arith.constant 0 : i32
    %c0_i32_0 = arith.constant 0 : i32
    %c0_i32_1 = arith.constant 0 : i32
    return %c0_i32, %c0_i32_0 : i32, i32
  }
  func.func @transform_6(%arg0: i32) -> (i32, i32) {
    %c0_i32 = arith.constant 0 : i32
    %c0_i32_0 = arith.constant 0 : i32
    %c0_i32_1 = arith.constant 0 : i32
    return %c0_i32, %c0_i32_0 : i32, i32
  }
  func.func @transform_7(%arg0: i32) -> (i32, i32) {
    %c0_i32 = arith.constant 0 : i32
    %c0_i32_0 = arith.constant 0 : i32
    %c0_i32_1 = arith.constant 0 : i32
    return %c0_i32, %c0_i32_0 : i32, i32
  }
  func.func @transform_8(%arg0: i32) -> (i32, i32) {
    %c0_i32 = arith.constant 0 : i32
    %c0_i32_0 = arith.constant 0 : i32
    %c0_i32_1 = arith.constant 0 : i32
    return %c0_i32, %c0_i32_0 : i32, i32
  }
  func.func @transform_9(%arg0: i32) -> (i32, i32) {
    %c0_i32 = arith.constant 0 : i32
    %c0_i32_0 = arith.constant 0 : i32
    %c0_i32_1 = arith.constant 0 : i32
    return %c0_i32, %c0_i32_0 : i32, i32
  }
  func.func @transform_10(%arg0: i32) -> (i32, i32) {
    %c0_i32 = arith.constant 0 : i32
    %c0_i32_0 = arith.constant 0 : i32
    %c0_i32_1 = arith.constant 0 : i32
    return %c0_i32, %c0_i32_0 : i32, i32
  }
  func.func @transform_11(%arg0: i32) -> (i32, i32) {
    %c0_i32 = arith.constant 0 : i32
    %c0_i32_0 = arith.constant 0 : i32
    %c0_i32_1 = arith.constant 0 : i32
    return %c0_i32, %c0_i32_0 : i32, i32
  }
  func.func @transform_12(%arg0: i32) -> (i32, i32) {
    %c0_i32 = arith.constant 0 : i32
    %c0_i32_0 = arith.constant 0 : i32
    %c0_i32_1 = arith.constant 0 : i32
    return %c0_i32, %c0_i32_0 : i32, i32
  }
  func.func @transform_13(%arg0: i32) -> (i32, i32) {
    %c0_i32 = arith.constant 0 : i32
    %c0_i32_0 = arith.constant 0 : i32
    %c0_i32_1 = arith.constant 0 : i32
    return %c0_i32, %c0_i32_0 : i32, i32
  }
  func.func @transform_14(%arg0: i32) -> (i32, i32) {
    %c0_i32 = arith.constant 0 : i32
    %c0_i32_0 = arith.constant 0 : i32
    %c0_i32_1 = arith.constant 0 : i32
    return %c0_i32, %c0_i32_0 : i32, i32
  }
  func.func @transform_15(%arg0: i32) -> (i32, i32) {
    %c0_i32 = arith.constant 0 : i32
    %c0_i32_0 = arith.constant 0 : i32
    %c0_i32_1 = arith.constant 0 : i32
    return %c0_i32, %c0_i32_0 : i32, i32
  }
  func.func @transform_16(%arg0: i32) -> (i32, i32) {
    %c0_i32 = arith.constant 0 : i32
    %c0_i32_0 = arith.constant 0 : i32
    %c0_i32_1 = arith.constant 0 : i32
    return %c0_i32, %c0_i32_0 : i32, i32
  }
  func.func @transform_17(%arg0: i32) -> (i32, i32) {
    %c0_i32 = arith.constant 0 : i32
    %c0_i32_0 = arith.constant 0 : i32
    %c0_i32_1 = arith.constant 0 : i32
    return %c0_i32, %c0_i32_0 : i32, i32
  }
  func.func @transform_18(%arg0: i32) -> (i32, i32) {
    %c0_i32 = arith.constant 0 : i32
    %c0_i32_0 = arith.constant 0 : i32
    %c0_i32_1 = arith.constant 0 : i32
    return %c0_i32, %c0_i32_0 : i32, i32
  }
  func.func @transform_19(%arg0: i32) -> (i32, i32) {
    %c0_i32 = arith.constant 0 : i32
    %c0_i32_0 = arith.constant 0 : i32
    %c0_i32_1 = arith.constant 0 : i32
    return %c0_i32, %c0_i32_0 : i32, i32
  }
  func.func @transform_20(%arg0: i32) -> (i32, i32) {
    %c0_i32 = arith.constant 0 : i32
    %c0_i32_0 = arith.constant 0 : i32
    return %arg0, %c0_i32 : i32, i32
  }
}

</mosaic_0001>

<llo_original>
// kernel: tpu_custom_call.1
$region0: #{tpu_custom_call.1}
  #allocation0 [shape = 'u32[]', space=smem, size = 0x4, offset = 0x4, fixed_abs, tag = 'smem constant byte address 0x4 - core index']
  #allocation1 [shape = 'u32[144,128]{1,0:T(1,128)}', space=vmem, size = 0x12000, scoped, tag = 'internal scratch']
  #allocation2 [shape = 'f32[1,1]{1,0:T(1,128)S(1)}', space=vmem, size = 0x200, scoped, tag = 'scoped memory for tpu_custom_call.1']
  %s0 = inlined_call_operand.vmem [shape: bf16[256,16], index: 0, kind: input, shape index: {}]
  %s1 = inlined_call_operand.hbm [shape: bf16[16,64], index: 1, kind: input, shape index: {}]
  %s2 = inlined_call_operand.vmem [shape: f32[1,64], index: 2, kind: input, shape index: {}]
  %s3 = inlined_call_operand.vmem [shape: bf16[64,64], index: 3, kind: input, shape index: {}]
  %s4 = inlined_call_operand.hbm [shape: f32[1,64], index: 4, kind: input, shape index: {}]
  %s5 = inlined_call_operand.vmem [shape: bf16[64,64], index: 5, kind: input, shape index: {}]
  %s6 = inlined_call_operand.hbm [shape: f32[1,64], index: 6, kind: input, shape index: {}]
  %s7 = inlined_call_operand.vmem [shape: bf16[64,64], index: 7, kind: input, shape index: {}]
  %s8 = inlined_call_operand.hbm [shape: f32[1,64], index: 8, kind: input, shape index: {}]
  %s9 = inlined_call_operand.hbm [shape: bf16[16,64], index: 9, kind: input, shape index: {}]
  %s10 = inlined_call_operand.vmem [shape: bf16[64,64], index: 10, kind: input, shape index: {}]
  %s11 = inlined_call_operand.hbm [shape: f32[1,64], index: 11, kind: input, shape index: {}]
  %s12 = inlined_call_operand.vmem [shape: bf16[64,64], index: 12, kind: input, shape index: {}]
  %s13 = inlined_call_operand.vmem [shape: f32[1,64], index: 13, kind: input, shape index: {}]
  %s14 = inlined_call_operand.vmem [shape: bf16[64,64], index: 14, kind: input, shape index: {}]
  %s15 = inlined_call_operand.vmem [shape: f32[1,64], index: 15, kind: input, shape index: {}]
  %s16 = inlined_call_operand.hbm [shape: bf16[64,64], index: 16, kind: input, shape index: {}]
  %s17 = inlined_call_operand.vmem [shape: f32[1,64], index: 17, kind: input, shape index: {}]
  %s18 = inlined_call_operand.vmem [shape: f32[1,64], index: 18, kind: input, shape index: {}]
  %s19 = inlined_call_operand.<no memory space> [shape: f32[1,1], index: 19, kind: input, shape index: {}]
  %s20 = inlined_call_operand.vmem [shape: f32[256,1], index: 20, kind: output, shape index: {}]
  %s21 = sld [smem:[#allocation0]]
  $region141: #{tpu_custom_call.1} parent=0
    _
  %s23 = ssub.s32 1, %s21
  %s24 = scalar_select 0, %s23, %s21
  %v25 = vstv %s19
  %26 = vst [vmem:[#allocation2] sm:$0x1] %v25
  $region1: #{tpu_custom_call.1} parent=0
    #allocation3 [shape = 'u8[4096]{0}', space=vmem, size = 0x1000, scoped, tag = 'input window, operand 1, single buffered']
    #allocation4 [shape = 's32[2]{0}', space=sflag, size = 0x8, scoped, tag = 'scoped memory for tpu_custom_call.1']
    #allocation5 [shape = 'u8[512]{0}', space=vmem, size = 0x400, scoped, tag = 'input window, operand 4, single buffered']
    #allocation6 [shape = 's32[1]{0}', space=sflag, size = 0x4, scoped, tag = 'scoped memory for tpu_custom_call.1']
    #allocation7 [shape = 'u8[512]{0}', space=vmem, size = 0x400, scoped, tag = 'input window, operand 6, single buffered']
    #allocation8 [shape = 'u8[512]{0}', space=vmem, size = 0x400, scoped, tag = 'input window, operand 8, single buffered']
    #allocation9 [shape = 's32[1]{0}', space=sflag, size = 0x4, scoped, tag = 'scoped memory for tpu_custom_call.1']
    #allocation10 [shape = 'u8[4096]{0}', space=vmem, size = 0x1000, scoped, tag = 'input window, operand 9, single buffered']
    #allocation11 [shape = 'u8[512]{0}', space=vmem, size = 0x400, scoped, tag = 'input window, operand 11, single buffered']
    #allocation12 [shape = 's32[1]{0}', space=sflag, size = 0x4, scoped, tag = 'scoped memory for tpu_custom_call.1']
    #allocation13 [shape = 'u8[16384]{0}', space=vmem, size = 0x4000, scoped, tag = 'input window, operand 16, single buffered']
    %27 = vsyncpa [#allocation4], 0
    %28 = vsyncpa [#allocation6], 0
    %29 = vsyncpa [#allocation9], 0
    %30 = vsyncpa [#allocation12], 0
    loop: start=0, step=1, limit=4
    $region2: #{tpu_custom_call.1} parent=1 // loop_pre_header
      _
    $region3: #{tpu_custom_call.1} parent=1 // loop_header
      %s32 = sphi 0, %s36
      %p33 = scmp.ge.s32.totalorder %s32, 4
      %s42 = sphi 0, %s44
      %s45 = sphi 0, %s42
      %s46 = sphi 0, %s45
      %s62 = sphi 0, %s46
      %s66 = sphi 0, %s66
      %s68 = sphi 0, %s66
      %s69 = sphi 0, %s68
      %s83 = sphi 0, %s69
      %s87 = sphi 0, %s87
      %s89 = sphi 0, %s87
      %s90 = sphi 0, %s89
      %s104 = sphi 0, %s90
      %s108 = sphi 0, %s108
      %s110 = sphi 0, %s108
      %s111 = sphi 0, %s110
      %s125 = sphi 0, %s111
      %s129 = sphi 0, %s129
      %s131 = sphi 0, %s129
      %s132 = sphi 0, %s131
      %s146 = sphi 0, %s132
      %s150 = sphi 0, %s150
      %s152 = sphi 0, %s150
      %s153 = sphi 0, %s152
      %s167 = sphi 0, %s153
      %s171 = sphi 0, %s171
      %s173 = sphi 0, %s171
      %s174 = sphi 0, %s173
      %s188 = sphi 0, %s174
      %s192 = sphi 0, %s192
      %s194 = sphi 0, %s192
      %s195 = sphi 0, %s194
      %s209 = sphi 0, %s195
      %s213 = sphi 0, %s213
      %s215 = sphi 0, %s213
      %s216 = sphi 0, %s215
      %s230 = sphi 0, %s216
      %s234 = sphi 0, %s234
      %s236 = sphi 0, %s234
      %s237 = sphi 0, %s236
      %s251 = sphi 0, %s237
      %s255 = sphi 0, %s255
      %s257 = sphi 0, %s255
      %s258 = sphi 0, %s257
      %s272 = sphi 0, %s258
      %s276 = sphi 0, %s276
      %s278 = sphi 0, %s276
      %s279 = sphi 0, %s278
      %s293 = sphi 0, %s279
      %s297 = sphi 0, %s297
      %s299 = sphi 0, %s297
      %s300 = sphi 0, %s299
      %s314 = sphi 0, %s300
      %s318 = sphi 0, %s318
      %s320 = sphi 0, %s318
      %s321 = sphi 0, %s320
      %s335 = sphi 0, %s321
      %s339 = sphi 0, %s339
      %s341 = sphi 0, %s339
      %s342 = sphi 0, %s341
      %s356 = sphi 0, %s342
      %s360 = sphi 0, %s360
      %s362 = sphi 0, %s360
      %s363 = sphi 0, %s362
      %s377 = sphi 0, %s363
      %s381 = sphi 0, %s381
      %s383 = sphi 0, %s381
      %s384 = sphi 0, %s383
      %s398 = sphi 0, %s384
      %s402 = sphi 0, %s402
      %s404 = sphi 0, %s402
      %s405 = sphi 0, %s404
      %s419 = sphi 0, %s405
      %s423 = sphi 0, %s423
      %s425 = sphi 0, %s423
      %s426 = sphi 0, %s425
      %s440 = sphi 0, %s426
      %s444 = sphi 0, %s444
      %s446 = sphi 0, %s444
      %s447 = sphi 0, %s446
      %s461 = sphi 0, %s447
      %s467 = sphi 0, %s469
      %s470 = sphi 0, %s467
      %s471 = sphi 0, %s470
      %s487 = sphi 0, %s471
    $region4: #{tpu_custom_call.1} parent=1 // loop_header_branch
      %35 = sbr.rel (%p33) target = $region8
    $region5: #{tpu_custom_call.1} parent=1 // loop_body
      %s37 = ssub.s32 %s32, 1
      %s38 = ssub.s32 %s32, 2
      %s39 = sadd.s32 %s32, 1
      %s40 = ssub.s32 %s32, %s39
      %p41 = scmp.eq.s32.totalorder %s40, 0
      %s43 = sadd.s32 %s42, 1
      %s44 = scalar_select %p41, %s42, %s43
      %p47 = pneg %p41
      %p48 = scmp.eq.s32.totalorder %s32, 1
      %p49 = por %p47, %p48
      %p50 = scmp.ne.s32.totalorder %s42, %s45
      %p51 = scmp.eq.s32.totalorder %s32, 0
      %p52 = por %p50, %p51
      %p53 = scmp.ne.s32.totalorder %s42, %s45
      %p54 = scmp.eq.s32.totalorder %s37, 1
      %p55 = por %p53, %p54
      %p56 = scmp.ne.s32.totalorder %s45, %s46
      %p57 = scmp.eq.s32.totalorder %s37, 0
      %p58 = por %p56, %p57
      %p59 = scmp.ne.s32.totalorder %s45, %s46
      %p60 = scmp.eq.s32.totalorder %s38, 1
      %p61 = por %p59, %p60
      %p63 = scmp.ne.s32.totalorder %s46, %s62
      %p64 = scmp.eq.s32.totalorder %s38, 0
      %p65 = por %p63, %p64
      %s67 = sadd.s32 %s66, 1
      %p70 = scmp.eq.s32.totalorder %s32, 1
      %p71 = scmp.ne.s32.totalorder %s66, %s68
      %p72 = scmp.eq.s32.totalorder %s32, 0
      %p73 = por %p71, %p72
      %p74 = scmp.ne.s32.totalorder %s66, %s68
      %p75 = scmp.eq.s32.totalorder %s37, 1
      %p76 = por %p74, %p75
      %p77 = scmp.ne.s32.totalorder %s68, %s69
      %p78 = scmp.eq.s32.totalorder %s37, 0
      %p79 = por %p77, %p78
      %p80 = scmp.ne.s32.totalorder %s68, %s69
      %p81 = scmp.eq.s32.totalorder %s38, 1
      %p82 = por %p80, %p81
      %p84 = scmp.ne.s32.totalorder %s69, %s83
      %p85 = scmp.eq.s32.totalorder %s38, 0
      %p86 = por %p84, %p85
      %s88 = sadd.s32 %s87, 1
      %p91 = scmp.eq.s32.totalorder %s32, 1
      %p92 = scmp.ne.s32.totalorder %s87, %s89
      %p93 = scmp.eq.s32.totalorder %s32, 0
      %p94 = por %p92, %p93
      %p95 = scmp.ne.s32.totalorder %s87, %s89
      %p96 = scmp.eq.s32.totalorder %s37, 1
      %p97 = por %p95, %p96
      %p98 = scmp.ne.s32.totalorder %s89, %s90
      %p99 = scmp.eq.s32.totalorder %s37, 0
      %p100 = por %p98, %p99
      %p101 = scmp.ne.s32.totalorder %s89, %s90
      %p102 = scmp.eq.s32.totalorder %s38, 1
      %p103 = por %p101, %p102
      %p105 = scmp.ne.s32.totalorder %s90, %s104
      %p106 = scmp.eq.s32.totalorder %s38, 0
      %p107 = por %p105, %p106
      %s109 = sadd.s32 %s108, 1
      %p112 = scmp.eq.s32.totalorder %s32, 1
      %p113 = scmp.ne.s32.totalorder %s108, %s110
      %p114 = scmp.eq.s32.totalorder %s32, 0
      %p115 = por %p113, %p114
      %p116 = scmp.ne.s32.totalorder %s108, %s110
      %p117 = scmp.eq.s32.totalorder %s37, 1
      %p118 = por %p116, %p117
      %p119 = scmp.ne.s32.totalorder %s110, %s111
      %p120 = scmp.eq.s32.totalorder %s37, 0
      %p121 = por %p119, %p120
      %p122 = scmp.ne.s32.totalorder %s110, %s111
      %p123 = scmp.eq.s32.totalorder %s38, 1
      %p124 = por %p122, %p123
      %p126 = scmp.ne.s32.totalorder %s111, %s125
      %p127 = scmp.eq.s32.totalorder %s38, 0
      %p128 = por %p126, %p127
      %s130 = sadd.s32 %s129, 1
      %p133 = scmp.eq.s32.totalorder %s32, 1
      %p134 = scmp.ne.s32.totalorder %s129, %s131
      %p135 = scmp.eq.s32.totalorder %s32, 0
      %p136 = por %p134, %p135
      %p137 = scmp.ne.s32.totalorder %s129, %s131
      %p138 = scmp.eq.s32.totalorder %s37, 1
      %p139 = por %p137, %p138
      %p140 = scmp.ne.s32.totalorder %s131, %s132
      %p141 = scmp.eq.s32.totalorder %s37, 0
      %p142 = por %p140, %p141
      %p143 = scmp.ne.s32.totalorder %s131, %s132
      %p144 = scmp.eq.s32.totalorder %s38, 1
      %p145 = por %p143, %p144
      %p147 = scmp.ne.s32.totalorder %s132, %s146
      %p148 = scmp.eq.s32.totalorder %s38, 0
      %p149 = por %p147, %p148
      %s151 = sadd.s32 %s150, 1
      %p154 = scmp.eq.s32.totalorder %s32, 1
      %p155 = scmp.ne.s32.totalorder %s150, %s152
      %p156 = scmp.eq.s32.totalorder %s32, 0
      %p157 = por %p155, %p156
      %p158 = scmp.ne.s32.totalorder %s150, %s152
      %p159 = scmp.eq.s32.totalorder %s37, 1
      %p160 = por %p158, %p159
      %p161 = scmp.ne.s32.totalorder %s152, %s153
      %p162 = scmp.eq.s32.totalorder %s37, 0
      %p163 = por %p161, %p162
      %p164 = scmp.ne.s32.totalorder %s152, %s153
      %p165 = scmp.eq.s32.totalorder %s38, 1
      %p166 = por %p164, %p165
      %p168 = scmp.ne.s32.totalorder %s153, %s167
      %p169 = scmp.eq.s32.totalorder %s38, 0
      %p170 = por %p168, %p169
      %s172 = sadd.s32 %s171, 1
      %p175 = scmp.eq.s32.totalorder %s32, 1
      %p176 = scmp.ne.s32.totalorder %s171, %s173
      %p177 = scmp.eq.s32.totalorder %s32, 0
      %p178 = por %p176, %p177
      %p179 = scmp.ne.s32.totalorder %s171, %s173
      %p180 = scmp.eq.s32.totalorder %s37, 1
      %p181 = por %p179, %p180
      %p182 = scmp.ne.s32.totalorder %s173, %s174
      %p183 = scmp.eq.s32.totalorder %s37, 0
      %p184 = por %p182, %p183
      %p185 = scmp.ne.s32.totalorder %s173, %s174
      %p186 = scmp.eq.s32.totalorder %s38, 1
      %p187 = por %p185, %p186
      %p189 = scmp.ne.s32.totalorder %s174, %s188
      %p190 = scmp.eq.s32.totalorder %s38, 0
      %p191 = por %p189, %p190
      %s193 = sadd.s32 %s192, 1
      %p196 = scmp.eq.s32.totalorder %s32, 1
      %p197 = scmp.ne.s32.totalorder %s192, %s194
      %p198 = scmp.eq.s32.totalorder %s32, 0
      %p199 = por %p197, %p198
      %p200 = scmp.ne.s32.totalorder %s192, %s194
      %p201 = scmp.eq.s32.totalorder %s37, 1
      %p202 = por %p200, %p201
      %p203 = scmp.ne.s32.totalorder %s194, %s195
      %p204 = scmp.eq.s32.totalorder %s37, 0
      %p205 = por %p203, %p204
      %p206 = scmp.ne.s32.totalorder %s194, %s195
      %p207 = scmp.eq.s32.totalorder %s38, 1
      %p208 = por %p206, %p207
      %p210 = scmp.ne.s32.totalorder %s195, %s209
      %p211 = scmp.eq.s32.totalorder %s38, 0
      %p212 = por %p210, %p211
      %s214 = sadd.s32 %s213, 1
      %p217 = scmp.eq.s32.totalorder %s32, 1
      %p218 = scmp.ne.s32.totalorder %s213, %s215
      %p219 = scmp.eq.s32.totalorder %s32, 0
      %p220 = por %p218, %p219
      %p221 = scmp.ne.s32.totalorder %s213, %s215
      %p222 = scmp.eq.s32.totalorder %s37, 1
      %p223 = por %p221, %p222
      %p224 = scmp.ne.s32.totalorder %s215, %s216
      %p225 = scmp.eq.s32.totalorder %s37, 0
      %p226 = por %p224, %p225
      %p227 = scmp.ne.s32.totalorder %s215, %s216
      %p228 = scmp.eq.s32.totalorder %s38, 1
      %p229 = por %p227, %p228
      %p231 = scmp.ne.s32.totalorder %s216, %s230
      %p232 = scmp.eq.s32.totalorder %s38, 0
      %p233 = por %p231, %p232
      %s235 = sadd.s32 %s234, 1
      %p238 = scmp.eq.s32.totalorder %s32, 1
      %p239 = scmp.ne.s32.totalorder %s234, %s236
      %p240 = scmp.eq.s32.totalorder %s32, 0
      %p241 = por %p239, %p240
      %p242 = scmp.ne.s32.totalorder %s234, %s236
      %p243 = scmp.eq.s32.totalorder %s37, 1
      %p244 = por %p242, %p243
      %p245 = scmp.ne.s32.totalorder %s236, %s237
      %p246 = scmp.eq.s32.totalorder %s37, 0
      %p247 = por %p245, %p246
      %p248 = scmp.ne.s32.totalorder %s236, %s237
      %p249 = scmp.eq.s32.totalorder %s38, 1
      %p250 = por %p248, %p249
      %p252 = scmp.ne.s32.totalorder %s237, %s251
      %p253 = scmp.eq.s32.totalorder %s38, 0
      %p254 = por %p252, %p253
      %s256 = sadd.s32 %s255, 1
      %p259 = scmp.eq.s32.totalorder %s32, 1
      %p260 = scmp.ne.s32.totalorder %s255, %s257
      %p261 = scmp.eq.s32.totalorder %s32, 0
      %p262 = por %p260, %p261
      %p263 = scmp.ne.s32.totalorder %s255, %s257
      %p264 = scmp.eq.s32.totalorder %s37, 1
      %p265 = por %p263, %p264
      %p266 = scmp.ne.s32.totalorder %s257, %s258
      %p267 = scmp.eq.s32.totalorder %s37, 0
      %p268 = por %p266, %p267
      %p269 = scmp.ne.s32.totalorder %s257, %s258
      %p270 = scmp.eq.s32.totalorder %s38, 1
      %p271 = por %p269, %p270
      %p273 = scmp.ne.s32.totalorder %s258, %s272
      %p274 = scmp.eq.s32.totalorder %s38, 0
      %p275 = por %p273, %p274
      %s277 = sadd.s32 %s276, 1
      %p280 = scmp.eq.s32.totalorder %s32, 1
      %p281 = scmp.ne.s32.totalorder %s276, %s278
      %p282 = scmp.eq.s32.totalorder %s32, 0
      %p283 = por %p281, %p282
      %p284 = scmp.ne.s32.totalorder %s276, %s278
      %p285 = scmp.eq.s32.totalorder %s37, 1
      %p286 = por %p284, %p285
      %p287 = scmp.ne.s32.totalorder %s278, %s279
      %p288 = scmp.eq.s32.totalorder %s37, 0
      %p289 = por %p287, %p288
      %p290 = scmp.ne.s32.totalorder %s278, %s279
      %p291 = scmp.eq.s32.totalorder %s38, 1
      %p292 = por %p290, %p291
      %p294 = scmp.ne.s32.totalorder %s279, %s293
      %p295 = scmp.eq.s32.totalorder %s38, 0
      %p296 = por %p294, %p295
      %s298 = sadd.s32 %s297, 1
      %p301 = scmp.eq.s32.totalorder %s32, 1
      %p302 = scmp.ne.s32.totalorder %s297, %s299
      %p303 = scmp.eq.s32.totalorder %s32, 0
      %p304 = por %p302, %p303
      %p305 = scmp.ne.s32.totalorder %s297, %s299
      %p306 = scmp.eq.s32.totalorder %s37, 1
      %p307 = por %p305, %p306
      %p308 = scmp.ne.s32.totalorder %s299, %s300
      %p309 = scmp.eq.s32.totalorder %s37, 0
      %p310 = por %p308, %p309
      %p311 = scmp.ne.s32.totalorder %s299, %s300
      %p312 = scmp.eq.s32.totalorder %s38, 1
      %p313 = por %p311, %p312
      %p315 = scmp.ne.s32.totalorder %s300, %s314
      %p316 = scmp.eq.s32.totalorder %s38, 0
      %p317 = por %p315, %p316
      %s319 = sadd.s32 %s318, 1
      %p322 = scmp.eq.s32.totalorder %s32, 1
      %p323 = scmp.ne.s32.totalorder %s318, %s320
      %p324 = scmp.eq.s32.totalorder %s32, 0
      %p325 = por %p323, %p324
      %p326 = scmp.ne.s32.totalorder %s318, %s320
      %p327 = scmp.eq.s32.totalorder %s37, 1
      %p328 = por %p326, %p327
      %p329 = scmp.ne.s32.totalorder %s320, %s321
      %p330 = scmp.eq.s32.totalorder %s37, 0
      %p331 = por %p329, %p330
      %p332 = scmp.ne.s32.totalorder %s320, %s321
      %p333 = scmp.eq.s32.totalorder %s38, 1
      %p334 = por %p332, %p333
      %p336 = scmp.ne.s32.totalorder %s321, %s335
      %p337 = scmp.eq.s32.totalorder %s38, 0
      %p338 = por %p336, %p337
      %s340 = sadd.s32 %s339, 1
      %p343 = scmp.eq.s32.totalorder %s32, 1
      %p344 = scmp.ne.s32.totalorder %s339, %s341
      %p345 = scmp.eq.s32.totalorder %s32, 0
      %p346 = por %p344, %p345
      %p347 = scmp.ne.s32.totalorder %s339, %s341
      %p348 = scmp.eq.s32.totalorder %s37, 1
      %p349 = por %p347, %p348
      %p350 = scmp.ne.s32.totalorder %s341, %s342
      %p351 = scmp.eq.s32.totalorder %s37, 0
      %p352 = por %p350, %p351
      %p353 = scmp.ne.s32.totalorder %s341, %s342
      %p354 = scmp.eq.s32.totalorder %s38, 1
      %p355 = por %p353, %p354
      %p357 = scmp.ne.s32.totalorder %s342, %s356
      %p358 = scmp.eq.s32.totalorder %s38, 0
      %p359 = por %p357, %p358
      %s361 = sadd.s32 %s360, 1
      %p364 = scmp.eq.s32.totalorder %s32, 1
      %p365 = scmp.ne.s32.totalorder %s360, %s362
      %p366 = scmp.eq.s32.totalorder %s32, 0
      %p367 = por %p365, %p366
      %p368 = scmp.ne.s32.totalorder %s360, %s362
      %p369 = scmp.eq.s32.totalorder %s37, 1
      %p370 = por %p368, %p369
      %p371 = scmp.ne.s32.totalorder %s362, %s363
      %p372 = scmp.eq.s32.totalorder %s37, 0
      %p373 = por %p371, %p372
      %p374 = scmp.ne.s32.totalorder %s362, %s363
      %p375 = scmp.eq.s32.totalorder %s38, 1
      %p376 = por %p374, %p375
      %p378 = scmp.ne.s32.totalorder %s363, %s377
      %p379 = scmp.eq.s32.totalorder %s38, 0
      %p380 = por %p378, %p379
      %s382 = sadd.s32 %s381, 1
      %p385 = scmp.eq.s32.totalorder %s32, 1
      %p386 = scmp.ne.s32.totalorder %s381, %s383
      %p387 = scmp.eq.s32.totalorder %s32, 0
      %p388 = por %p386, %p387
      %p389 = scmp.ne.s32.totalorder %s381, %s383
      %p390 = scmp.eq.s32.totalorder %s37, 1
      %p391 = por %p389, %p390
      %p392 = scmp.ne.s32.totalorder %s383, %s384
      %p393 = scmp.eq.s32.totalorder %s37, 0
      %p394 = por %p392, %p393
      %p395 = scmp.ne.s32.totalorder %s383, %s384
      %p396 = scmp.eq.s32.totalorder %s38, 1
      %p397 = por %p395, %p396
      %p399 = scmp.ne.s32.totalorder %s384, %s398
      %p400 = scmp.eq.s32.totalorder %s38, 0
      %p401 = por %p399, %p400
      %s403 = sadd.s32 %s402, 1
      %p406 = scmp.eq.s32.totalorder %s32, 1
      %p407 = scmp.ne.s32.totalorder %s402, %s404
      %p408 = scmp.eq.s32.totalorder %s32, 0
      %p409 = por %p407, %p408
      %p410 = scmp.ne.s32.totalorder %s402, %s404
      %p411 = scmp.eq.s32.totalorder %s37, 1
      %p412 = por %p410, %p411
      %p413 = scmp.ne.s32.totalorder %s404, %s405
      %p414 = scmp.eq.s32.totalorder %s37, 0
      %p415 = por %p413, %p414
      %p416 = scmp.ne.s32.totalorder %s404, %s405
      %p417 = scmp.eq.s32.totalorder %s38, 1
      %p418 = por %p416, %p417
      %p420 = scmp.ne.s32.totalorder %s405, %s419
      %p421 = scmp.eq.s32.totalorder %s38, 0
      %p422 = por %p420, %p421
      %s424 = sadd.s32 %s423, 1
      %p427 = scmp.eq.s32.totalorder %s32, 1
      %p428 = scmp.ne.s32.totalorder %s423, %s425
      %p429 = scmp.eq.s32.totalorder %s32, 0
      %p430 = por %p428, %p429
      %p431 = scmp.ne.s32.totalorder %s423, %s425
      %p432 = scmp.eq.s32.totalorder %s37, 1
      %p433 = por %p431, %p432
      %p434 = scmp.ne.s32.totalorder %s425, %s426
      %p435 = scmp.eq.s32.totalorder %s37, 0
      %p436 = por %p434, %p435
      %p437 = scmp.ne.s32.totalorder %s425, %s426
      %p438 = scmp.eq.s32.totalorder %s38, 1
      %p439 = por %p437, %p438
      %p441 = scmp.ne.s32.totalorder %s426, %s440
      %p442 = scmp.eq.s32.totalorder %s38, 0
      %p443 = por %p441, %p442
      %s445 = sadd.s32 %s444, 1
      %p448 = scmp.eq.s32.totalorder %s32, 1
      %p449 = scmp.ne.s32.totalorder %s444, %s446
      %p450 = scmp.eq.s32.totalorder %s32, 0
      %p451 = por %p449, %p450
      %p452 = scmp.ne.s32.totalorder %s444, %s446
      %p453 = scmp.eq.s32.totalorder %s37, 1
      %p454 = por %p452, %p453
      %p455 = scmp.ne.s32.totalorder %s446, %s447
      %p456 = scmp.eq.s32.totalorder %s37, 0
      %p457 = por %p455, %p456
      %p458 = scmp.ne.s32.totalorder %s446, %s447
      %p459 = scmp.eq.s32.totalorder %s38, 1
      %p460 = por %p458, %p459
      %p462 = scmp.ne.s32.totalorder %s447, %s461
      %p463 = scmp.eq.s32.totalorder %s38, 0
      %p464 = por %p462, %p463
      %s465 = ssub.s32 %s32, %s39
      %p466 = scmp.eq.s32.totalorder %s465, 0
      %s468 = sadd.s32 %s467, 1
      %s469 = scalar_select %p466, %s467, %s468
      %p472 = pneg %p466
      %p473 = scmp.eq.s32.totalorder %s32, 1
      %p474 = por %p472, %p473
      %p475 = scmp.ne.s32.totalorder %s467, %s470
      %p476 = scmp.eq.s32.totalorder %s32, 0
      %p477 = por %p475, %p476
      %p478 = scmp.ne.s32.totalorder %s467, %s470
      %p479 = scmp.eq.s32.totalorder %s37, 1
      %p480 = por %p478, %p479
      %p481 = scmp.ne.s32.totalorder %s470, %s471
      %p482 = scmp.eq.s32.totalorder %s37, 0
      %p483 = por %p481, %p482
      %p484 = scmp.ne.s32.totalorder %s470, %s471
      %p485 = scmp.eq.s32.totalorder %s38, 1
      %p486 = por %p484, %p485
      %p488 = scmp.ne.s32.totalorder %s471, %s487
      %p489 = scmp.eq.s32.totalorder %s38, 0
      %p490 = por %p488, %p489
      %p491 = scmp.le.s32.totalorder 1, %s32
      %p492 = scmp.lt.s32.totalorder %s32, 3
      %p493 = pnand %p491, %p492
      %p494 = pneg %p493
      // Predicated region
      $region9: #{tpu_custom_call.1} parent=5 // pred_check
        _
      $region10: #{tpu_custom_call.1} parent=5 // pred_check_branch
        %496 = sbr.rel (%p493) target = $region12
      $region11: #{tpu_custom_call.1} parent=5 // pred_region
        %s497 = ssub.s32 %s32, 1
        // Predicated region
        $region13: #{tpu_custom_call.1} parent=11 // pred_check
          %p498 = pneg %p79
        $region14: #{tpu_custom_call.1} parent=11 // pred_check_branch
          %500 = sbr.rel (%p498) target = $region16
        $region15: #{tpu_custom_call.1} parent=11 // pred_region
          %s502 = ssub.s32 128, 128
          %503 = vsyncadd [#allocation4], %s502
          %s504 = sshll.u32 [#allocation3], 4
          %s505 = int_to_ptr.vmem [resolvable:$true] %s504
          %510 = dma.hbm_to_vmem [thread:$0]  %s1, 128, %s505, [#allocation4], 64, 64, 4
        $region16: #{tpu_custom_call.1} parent=11 // pred_fallthru
          _
        // Predicated region
        $region17: #{tpu_custom_call.1} parent=11 // pred_check
          %p511 = pneg %p100
        $region18: #{tpu_custom_call.1} parent=11 // pred_check_branch
          %513 = sbr.rel (%p511) target = $region20
        $region19: #{tpu_custom_call.1} parent=11 // pred_region
          _
        $region20: #{tpu_custom_call.1} parent=11 // pred_fallthru
          _
        // Predicated region
        $region21: #{tpu_custom_call.1} parent=11 // pred_check
          %p514 = pneg %p121
        $region22: #{tpu_custom_call.1} parent=11 // pred_check_branch
          %516 = sbr.rel (%p514) target = $region24
        $region23: #{tpu_custom_call.1} parent=11 // pred_region
          _
        $region24: #{tpu_custom_call.1} parent=11 // pred_fallthru
          _
        // Predicated region
        $region25: #{tpu_custom_call.1} parent=11 // pred_check
          %p517 = pneg %p142
        $region26: #{tpu_custom_call.1} parent=11 // pred_check_branch
          %519 = sbr.rel (%p517) target = $region28
        $region27: #{tpu_custom_call.1} parent=11 // pred_region
          %s521 = ssub.s32 16, 16
          %522 = vsyncadd [#allocation6], %s521
          %s524 = sshll.u32 [#allocation5], 4
          %s525 = int_to_ptr.vmem [resolvable:$true] %s524
          %527 = dma.hbm_to_vmem [thread:$0]  %s4, 16, %s525, [#allocation6]
        $region28: #{tpu_custom_call.1} parent=11 // pred_fallthru
          _
        // Predicated region
        $region29: #{tpu_custom_call.1} parent=11 // pred_check
          %p528 = pneg %p163
        $region30: #{tpu_custom_call.1} parent=11 // pred_check_branch
          %530 = sbr.rel (%p528) target = $region32
        $region31: #{tpu_custom_call.1} parent=11 // pred_region
          _
        $region32: #{tpu_custom_call.1} parent=11 // pred_fallthru
          _
        // Predicated region
        $region33: #{tpu_custom_call.1} parent=11 // pred_check
          %p531 = pneg %p184
        $region34: #{tpu_custom_call.1} parent=11 // pred_check_branch
          %533 = sbr.rel (%p531) target = $region36
        $region35: #{tpu_custom_call.1} parent=11 // pred_region
          %s535 = ssub.s32 16, 16
          %536 = vsyncadd [#allocation6], %s535
          %s538 = sshll.u32 [#allocation7], 4
          %s539 = int_to_ptr.vmem [resolvable:$true] %s538
          %541 = dma.hbm_to_vmem [thread:$0]  %s6, 16, %s539, [#allocation6]
        $region36: #{tpu_custom_call.1} parent=11 // pred_fallthru
          _
        // Predicated region
        $region37: #{tpu_custom_call.1} parent=11 // pred_check
          %p542 = pneg %p205
        $region38: #{tpu_custom_call.1} parent=11 // pred_check_branch
          %544 = sbr.rel (%p542) target = $region40
        $region39: #{tpu_custom_call.1} parent=11 // pred_region
          _
        $region40: #{tpu_custom_call.1} parent=11 // pred_fallthru
          _
        // Predicated region
        $region41: #{tpu_custom_call.1} parent=11 // pred_check
          %p545 = pneg %p226
        $region42: #{tpu_custom_call.1} parent=11 // pred_check_branch
          %547 = sbr.rel (%p545) target = $region44
        $region43: #{tpu_custom_call.1} parent=11 // pred_region
          %s549 = ssub.s32 16, 16
          %550 = vsyncadd [#allocation9], %s549
          %s552 = sshll.u32 [#allocation8], 4
          %s553 = int_to_ptr.vmem [resolvable:$true] %s552
          %555 = dma.hbm_to_vmem [thread:$0]  %s8, 16, %s553, [#allocation9]
        $region44: #{tpu_custom_call.1} parent=11 // pred_fallthru
          _
        // Predicated region
        $region45: #{tpu_custom_call.1} parent=11 // pred_check
          %p556 = pneg %p247
        $region46: #{tpu_custom_call.1} parent=11 // pred_check_branch
          %558 = sbr.rel (%p556) target = $region48
        $region47: #{tpu_custom_call.1} parent=11 // pred_region
          %s560 = ssub.s32 128, 128
          %561 = vsyncadd [#allocation9], %s560
          %s562 = sshll.u32 [#allocation10], 4
          %s563 = int_to_ptr.vmem [resolvable:$true] %s562
          %568 = dma.hbm_to_vmem [thread:$0]  %s9, 128, %s563, [#allocation9], 64, 64, 4
        $region48: #{tpu_custom_call.1} parent=11 // pred_fallthru
          _
        // Predicated region
        $region49: #{tpu_custom_call.1} parent=11 // pred_check
          %p569 = pneg %p268
        $region50: #{tpu_custom_call.1} parent=11 // pred_check_branch
          %571 = sbr.rel (%p569) target = $region52
        $region51: #{tpu_custom_call.1} parent=11 // pred_region
          _
        $region52: #{tpu_custom_call.1} parent=11 // pred_fallthru
          _
        // Predicated region
        $region53: #{tpu_custom_call.1} parent=11 // pred_check
          %p572 = pneg %p289
        $region54: #{tpu_custom_call.1} parent=11 // pred_check_branch
          %574 = sbr.rel (%p572) target = $region56
        $region55: #{tpu_custom_call.1} parent=11 // pred_region
          %s576 = ssub.s32 16, 16
          %577 = vsyncadd [#allocation12], %s576
          %s579 = sshll.u32 [#allocation11], 4
          %s580 = int_to_ptr.vmem [resolvable:$true] %s579
          %582 = dma.hbm_to_vmem [thread:$0]  %s11, 16, %s580, [#allocation12]
        $region56: #{tpu_custom_call.1} parent=11 // pred_fallthru
          _
        // Predicated region
        $region57: #{tpu_custom_call.1} parent=11 // pred_check
          %p583 = pneg %p310
        $region58: #{tpu_custom_call.1} parent=11 // pred_check_branch
          %585 = sbr.rel (%p583) target = $region60
        $region59: #{tpu_custom_call.1} parent=11 // pred_region
          _
        $region60: #{tpu_custom_call.1} parent=11 // pred_fallthru
          _
        // Predicated region
        $region61: #{tpu_custom_call.1} parent=11 // pred_check
          %p586 = pneg %p331
        $region62: #{tpu_custom_call.1} parent=11 // pred_check_branch
          %588 = sbr.rel (%p586) target = $region64
        $region63: #{tpu_custom_call.1} parent=11 // pred_region
          _
        $region64: #{tpu_custom_call.1} parent=11 // pred_fallthru
          _
        // Predicated region
        $region65: #{tpu_custom_call.1} parent=11 // pred_check
          %p589 = pneg %p352
        $region66: #{tpu_custom_call.1} parent=11 // pred_check_branch
          %591 = sbr.rel (%p589) target = $region68
        $region67: #{tpu_custom_call.1} parent=11 // pred_region
          _
        $region68: #{tpu_custom_call.1} parent=11 // pred_fallthru
          _
        // Predicated region
        $region69: #{tpu_custom_call.1} parent=11 // pred_check
          %p592 = pneg %p373
        $region70: #{tpu_custom_call.1} parent=11 // pred_check_branch
          %594 = sbr.rel (%p592) target = $region72
        $region71: #{tpu_custom_call.1} parent=11 // pred_region
          _
        $region72: #{tpu_custom_call.1} parent=11 // pred_fallthru
          _
        // Predicated region
        $region73: #{tpu_custom_call.1} parent=11 // pred_check
          %p595 = pneg %p394
        $region74: #{tpu_custom_call.1} parent=11 // pred_check_branch
          %597 = sbr.rel (%p595) target = $region76
        $region75: #{tpu_custom_call.1} parent=11 // pred_region
          %s599 = ssub.s32 512, 512
          %600 = vsyncadd [#allocation12], %s599
          %s601 = sshll.u32 [#allocation13], 4
          %s602 = int_to_ptr.vmem [resolvable:$true] %s601
          %607 = dma.hbm_to_vmem [thread:$0]  %s16, 512, %s602, [#allocation12], 64, 64, 4
        $region76: #{tpu_custom_call.1} parent=11 // pred_fallthru
          _
        // Predicated region
        $region77: #{tpu_custom_call.1} parent=11 // pred_check
          %p608 = pneg %p415
        $region78: #{tpu_custom_call.1} parent=11 // pred_check_branch
          %610 = sbr.rel (%p608) target = $region80
        $region79: #{tpu_custom_call.1} parent=11 // pred_region
          _
        $region80: #{tpu_custom_call.1} parent=11 // pred_fallthru
          _
        // Predicated region
        $region81: #{tpu_custom_call.1} parent=11 // pred_check
          %p611 = pneg %p436
        $region82: #{tpu_custom_call.1} parent=11 // pred_check_branch
          %613 = sbr.rel (%p611) target = $region84
        $region83: #{tpu_custom_call.1} parent=11 // pred_region
          _
        $region84: #{tpu_custom_call.1} parent=11 // pred_fallthru
          _
        // Predicated region
        $region85: #{tpu_custom_call.1} parent=11 // pred_check
          %p614 = pneg %p457
        $region86: #{tpu_custom_call.1} parent=11 // pred_check_branch
          %616 = sbr.rel (%p614) target = $region88
        $region87: #{tpu_custom_call.1} parent=11 // pred_region
          _
        $region88: #{tpu_custom_call.1} parent=11 // pred_fallthru
          _
      $region12: #{tpu_custom_call.1} parent=5 // pred_fallthru
        _
      %p617 = scmp.lt.s32.totalorder %s32, 2
      // Predicated region
      $region89: #{tpu_custom_call.1} parent=5 // pred_check
        %p618 = pneg %p617
      $region90: #{tpu_custom_call.1} parent=5 // pred_check_branch
        %620 = sbr.rel (%p618) target = $region92
      $region91: #{tpu_custom_call.1} parent=5 // pred_region
        // Predicated region
        $region93: #{tpu_custom_call.1} parent=91 // pred_check
          %p621 = pneg %p52
        $region94: #{tpu_custom_call.1} parent=91 // pred_check_branch
          %623 = sbr.rel (%p621) target = $region96
        $region95: #{tpu_custom_call.1} parent=91 // pred_region
          %s624 = smul.u32 16, %s32
          %p625 = scmp.lt.s32.totalorder %s624, 31
          %s626 = scalar_select %p625, %s624, 31
          %s627 = smul.addr %s626, 4
          %s628 = scalar_lea.vmem %s0, %s627
          %s629 = smul.u32 16, %s32
        $region96: #{tpu_custom_call.1} parent=91 // pred_fallthru
          _
      $region92: #{tpu_custom_call.1} parent=5 // pred_fallthru
        _
      %p630 = scmp.le.s32.totalorder 1, %s32
      %p631 = scmp.lt.s32.totalorder %s32, 3
      %p632 = pnand %p630, %p631
      %p633 = pneg %p632
      // Predicated region
      $region97: #{tpu_custom_call.1} parent=5 // pred_check
        _
      $region98: #{tpu_custom_call.1} parent=5 // pred_check_branch
        %635 = sbr.rel (%p632) target = $region100
      $region99: #{tpu_custom_call.1} parent=5 // pred_region
        %s636 = ssub.s32 %s32, 1
        // Predicated region
        $region101: #{tpu_custom_call.1} parent=99 // pred_check
          %p637 = pneg %p79
        $region102: #{tpu_custom_call.1} parent=99 // pred_check_branch
          %639 = sbr.rel (%p637) target = $region104
        $region103: #{tpu_custom_call.1} parent=99 // pred_region
          %640 = dma.done [#allocation4], 128
        $region104: #{tpu_custom_call.1} parent=99 // pred_fallthru
          _
        // Predicated region
        $region105: #{tpu_custom_call.1} parent=99 // pred_check
          %p641 = pneg %p142
        $region106: #{tpu_custom_call.1} parent=99 // pred_check_branch
          %643 = sbr.rel (%p641) target = $region108
        $region107: #{tpu_custom_call.1} parent=99 // pred_region
          %644 = dma.done [#allocation6], 16
        $region108: #{tpu_custom_call.1} parent=99 // pred_fallthru
          _
        // Predicated region
        $region109: #{tpu_custom_call.1} parent=99 // pred_check
          %p645 = pneg %p184
        $region110: #{tpu_custom_call.1} parent=99 // pred_check_branch
          %647 = sbr.rel (%p645) target = $region112
        $region111: #{tpu_custom_call.1} parent=99 // pred_region
          %648 = dma.done [#allocation6], 16
        $region112: #{tpu_custom_call.1} parent=99 // pred_fallthru
          _
        // Predicated region
        $region113: #{tpu_custom_call.1} parent=99 // pred_check
          %p649 = pneg %p226
        $region114: #{tpu_custom_call.1} parent=99 // pred_check_branch
          %651 = sbr.rel (%p649) target = $region116
        $region115: #{tpu_custom_call.1} parent=99 // pred_region
          %652 = dma.done [#allocation9], 16
        $region116: #{tpu_custom_call.1} parent=99 // pred_fallthru
          _
        // Predicated region
        $region117: #{tpu_custom_call.1} parent=99 // pred_check
          %p653 = pneg %p247
        $region118: #{tpu_custom_call.1} parent=99 // pred_check_branch
          %655 = sbr.rel (%p653) target = $region120
        $region119: #{tpu_custom_call.1} parent=99 // pred_region
          %656 = dma.done [#allocation9], 128
        $region120: #{tpu_custom_call.1} parent=99 // pred_fallthru
          _
        // Predicated region
        $region121: #{tpu_custom_call.1} parent=99 // pred_check
          %p657 = pneg %p289
        $region122: #{tpu_custom_call.1} parent=99 // pred_check_branch
          %659 = sbr.rel (%p657) target = $region124
        $region123: #{tpu_custom_call.1} parent=99 // pred_region
          %660 = dma.done [#allocation12], 16
        $region124: #{tpu_custom_call.1} parent=99 // pred_fallthru
          _
        // Predicated region
        $region125: #{tpu_custom_call.1} parent=99 // pred_check
          %p661 = pneg %p394
        $region126: #{tpu_custom_call.1} parent=99 // pred_check_branch
          %663 = sbr.rel (%p661) target = $region128
        $region127: #{tpu_custom_call.1} parent=99 // pred_region
          %664 = dma.done [#allocation12], 512
        $region128: #{tpu_custom_call.1} parent=99 // pred_fallthru
          _
        %s665 = smul.u32 16, %s37
        %p666 = scmp.lt.s32.totalorder %s665, 31
        %s667 = scalar_select %p666, %s665, 31
        %s668 = smul.addr %s667, 4
        %s669 = scalar_lea.vmem %s0, %s668
        %p670 = pneg %p58
        %p671 = pneg %p55
        %p672 = pneg %p79
        %p673 = pneg %p76
        %p674 = pneg %p100
        %p675 = pneg %p97
        %p676 = pneg %p121
        %p677 = pneg %p118
        %p678 = pneg %p142
        %p679 = pneg %p139
        %p680 = pneg %p163
        %p681 = pneg %p160
        %p682 = pneg %p184
        %p683 = pneg %p181
        %p684 = pneg %p205
        %p685 = pneg %p202
        %p686 = pneg %p226
        %p687 = pneg %p223
        %p688 = pneg %p247
        %p689 = pneg %p244
        %p690 = pneg %p268
        %p691 = pneg %p265
        %p692 = pneg %p289
        %p693 = pneg %p286
        %p694 = pneg %p310
        %p695 = pneg %p307
        %p696 = pneg %p331
        %p697 = pneg %p328
        %p698 = pneg %p352
        %p699 = pneg %p349
        %p700 = pneg %p373
        %p701 = pneg %p370
        %p702 = pneg %p394
        %p703 = pneg %p391
        %p704 = pneg %p415
        %p705 = pneg %p412
        %p706 = pneg %p436
        %p707 = pneg %p433
        %p708 = pneg %p457
        %p709 = pneg %p454
        %p710 = pneg %p483
        %p711 = pneg %p480
        %s712 = smul.u32 16, %s37
        %p713 = scmp.lt.s32.totalorder %s712, 31
        %s714 = scalar_select %p713, %s712, 31
        %s715 = smul.addr %s714, 8
        %s716 = scalar_lea.vmem %s20, %s715
        %s717 = smul.u32 16, %s37
        %p718 = scmp.lt.s32.totalorder %s717, 31
        %s719 = scalar_select %p718, %s717, 31
        %s720 = smul.addr %s719, 4
        %s721 = scalar_lea.vmem %s0, %s720
        %s722 = smul.u32 16, %s37
        %s723 = smul.u32 16, %s37
        %p724 = scmp.lt.s32.totalorder %s723, 31
        %s725 = scalar_select %p724, %s723, 31
        %s726 = smul.addr %s725, 8
        %s727 = scalar_lea.vmem %s20, %s726
        %s728 = smul.u32 16, %s37
        %v730 = vld [vmem:[%s721] sm:$0xf]
        %v731 = vld [vmem:[%s721 + $0x4] sm:$0xf]
        %v732 = vld [vmem:[%s721 + $0x8] sm:$0xf]
        %v733 = vld [vmem:[%s721 + $0xc] sm:$0xf]
        %v734 = vld [vmem:[%s721 + $0x10] sm:$0xf]
        %v735 = vld [vmem:[%s721 + $0x14] sm:$0xf]
        %v736 = vld [vmem:[%s721 + $0x18] sm:$0xf]
        %v737 = vld [vmem:[%s721 + $0x1c] sm:$0xf]
        %v738 = vld [vmem:[%s721 + $0x20] sm:$0xf]
        %v739 = vld [vmem:[%s721 + $0x24] sm:$0xf]
        %v740 = vld [vmem:[%s721 + $0x28] sm:$0xf]
        %v741 = vld [vmem:[%s721 + $0x2c] sm:$0xf]
        %v742 = vld [vmem:[%s721 + $0x30] sm:$0xf]
        %v743 = vld [vmem:[%s721 + $0x34] sm:$0xf]
        %v744 = vld [vmem:[%s721 + $0x38] sm:$0xf]
        %v745 = vld [vmem:[%s721 + $0x3c] sm:$0xf]
        %v746 = vld [vmem:[#allocation3] sm:$0xf]
        %v747 = vld [vmem:[#allocation3 + $0x4] sm:$0xf]
        %v748 = vld [vmem:[%s2] sm:$0x1]
        %v750 = vlaneseq
        %v751 = vshrl.u32 %v750, 7
        %v752 = vsub.s32 0, %v751
        %v753 = vrot.slane %v748, %v752
        %v771 = vunpack.c.l.b16 %v730
        %v772 = vunpack.c.l.b16 %v731
        %v773 = vunpack.c.l.b16 %v732
        %v774 = vunpack.c.l.b16 %v733
        %v775 = vunpack.c.l.b16 %v734
        %v776 = vunpack.c.l.b16 %v735
        %v777 = vunpack.c.l.b16 %v736
        %v778 = vunpack.c.l.b16 %v737
        %v779 = vunpack.c.l.b16 %v738
        %v780 = vunpack.c.l.b16 %v739
        %v781 = vunpack.c.l.b16 %v740
        %v782 = vunpack.c.l.b16 %v741
        %v783 = vunpack.c.l.b16 %v742
        %v784 = vunpack.c.l.b16 %v743
        %v785 = vunpack.c.l.b16 %v744
        %v786 = vunpack.c.l.b16 %v745
        %v787 = vpack.c.b16 %v772, %v771
        %v788 = vpack.c.b16 %v774, %v773
        %v789 = vpack.c.b16 %v776, %v775
        %v790 = vpack.c.b16 %v778, %v777
        %v791 = vpack.c.b16 %v780, %v779
        %v792 = vpack.c.b16 %v782, %v781
        %v793 = vpack.c.b16 %v784, %v783
        %v794 = vpack.c.b16 %v786, %v785
        %v797 = vunpack.c.l.b16 %v746
        %v798 = vunpack.c.l.b16 %v747
        %v799 = vpack.c.b16 %v798, %v797
        %vm801 = vcmask 130048
        %v803 = vsel %vm801, %v787, 0
        %v806 = vsel %vm801, %v788, 0
        %v809 = vsel %vm801, %v789, 0
        %v812 = vsel %vm801, %v790, 0
        %v815 = vsel %vm801, %v791, 0
        %v818 = vsel %vm801, %v792, 0
        %v821 = vsel %vm801, %v793, 0
        %v824 = vsel %vm801, %v794, 0
        %826 = vmatprep.subr.bf16.mxu0 0
        %827 = vmatpush1.bf16.msra.mxu0 %v799
        %828 = vmatprep.subr.bf16.mxu0 0
        %829 = vmatpush1.bf16.msra.mxu0 0
        %830 = vmatprep.subr.bf16.mxu0 0
        %831 = vmatpush1.bf16.msra.mxu0 0
        %832 = vmatprep.subr.bf16.mxu0 0
        %833 = vmatpush1.bf16.msra.mxu0 0
        %834 = vmatprep.subr.bf16.mxu0 0
        %835 = vmatpush1.bf16.msra.mxu0 0
        %836 = vmatprep.subr.bf16.mxu0 0
        %837 = vmatpush1.bf16.msra.mxu0 0
        %838 = vmatprep.subr.bf16.mxu0 0
        %839 = vmatpush1.bf16.msra.mxu0 0
        %840 = vmatprep.subr.bf16.mxu0 0
        %841 = vmatpush1.bf16.msra.mxu0 0
        %842 = vmatprep.subr.bf16.mxu0 0
        %843 = vmatpush1.bf16.msra.mxu0 0
        %844 = vmatprep.subr.bf16.mxu0 0
        %845 = vmatpush1.bf16.msra.mxu0 0
        %846 = vmatprep.subr.bf16.mxu0 0
        %847 = vmatpush1.bf16.msra.mxu0 0
        %848 = vmatprep.subr.bf16.mxu0 0
        %849 = vmatpush1.bf16.msra.mxu0 0
        %850 = vmatprep.subr.bf16.mxu0 0
        %851 = vmatpush1.bf16.msra.mxu0 0
        %852 = vmatprep.subr.bf16.mxu0 0
        %853 = vmatpush1.bf16.msra.mxu0 0
        %854 = vmatprep.subr.bf16.mxu0 0
        %855 = vmatpush1.bf16.msra.mxu0 0
        %856 = vmatprep.subr.bf16.mxu0 0
        %857 = vmatpush1.bf16.msra.mxu0 0
        %858 = vmatprep.mubr.bf16.mxu0 0
        %859 = vmatmul.mubr.bf16.gmra.mrb[0].mxu0 %v803
        %v860 = vpop.f32.mrb[0].mxu0
        %v861 = vadd.f32 %v753, %v860
        %v862 = vpop.f32.mrb[0].mxu0
        %v863 = vpop.f32.mrb[0].mxu0
        %v864 = vadd.f32 %v753, %v863
        %v865 = vpop.f32.mrb[0].mxu0
        %866 = vmatprep.mubr.bf16.mxu0 0
        %867 = vmatmul.mubr.bf16.gmra.mrb[0].mxu0 %v806
        %v868 = vpop.f32.mrb[0].mxu0
        %v869 = vadd.f32 %v753, %v868
        %v870 = vpop.f32.mrb[0].mxu0
        %v871 = vpop.f32.mrb[0].mxu0
        %v872 = vadd.f32 %v753, %v871
        %v873 = vpop.f32.mrb[0].mxu0
        %874 = vmatprep.mubr.bf16.mxu0 0
        %875 = vmatmul.mubr.bf16.gmra.mrb[0].mxu0 %v809
        %v876 = vpop.f32.mrb[0].mxu0
        %v877 = vadd.f32 %v753, %v876
        %v878 = vpop.f32.mrb[0].mxu0
        %v879 = vpop.f32.mrb[0].mxu0
        %v880 = vadd.f32 %v753, %v879
        %v881 = vpop.f32.mrb[0].mxu0
        %882 = vmatprep.mubr.bf16.mxu0 0
        %883 = vmatmul.mubr.bf16.gmra.mrb[0].mxu0 %v812
        %v884 = vpop.f32.mrb[0].mxu0
        %v885 = vadd.f32 %v753, %v884
        %v886 = vpop.f32.mrb[0].mxu0
        %v887 = vpop.f32.mrb[0].mxu0
        %v888 = vadd.f32 %v753, %v887
        %v889 = vpop.f32.mrb[0].mxu0
        %890 = vmatprep.mubr.bf16.mxu0 0
        %891 = vmatmul.mubr.bf16.gmra.mrb[0].mxu0 %v815
        %v892 = vpop.f32.mrb[0].mxu0
        %v893 = vadd.f32 %v753, %v892
        %v894 = vpop.f32.mrb[0].mxu0
        %v895 = vpop.f32.mrb[0].mxu0
        %v896 = vadd.f32 %v753, %v895
        %v897 = vpop.f32.mrb[0].mxu0
        %898 = vmatprep.mubr.bf16.mxu0 0
        %899 = vmatmul.mubr.bf16.gmra.mrb[0].mxu0 %v818
        %v900 = vpop.f32.mrb[0].mxu0
        %v901 = vadd.f32 %v753, %v900
        %v902 = vpop.f32.mrb[0].mxu0
        %v903 = vpop.f32.mrb[0].mxu0
        %v904 = vadd.f32 %v753, %v903
        %v905 = vpop.f32.mrb[0].mxu0
        %906 = vmatprep.mubr.bf16.mxu0 0
        %907 = vmatmul.mubr.bf16.gmra.mrb[0].mxu0 %v821
        %v908 = vpop.f32.mrb[0].mxu0
        %v909 = vadd.f32 %v753, %v908
        %v910 = vpop.f32.mrb[0].mxu0
        %v911 = vpop.f32.mrb[0].mxu0
        %v912 = vadd.f32 %v753, %v911
        %v913 = vpop.f32.mrb[0].mxu0
        %914 = vmatprep.mubr.bf16.mxu0 0
        %915 = vmatmul.mubr.bf16.gmra.mrb[0].mxu0 %v824
        %v916 = vpop.f32.mrb[0].mxu0
        %v917 = vadd.f32 %v753, %v916
        %v918 = vpop.f32.mrb[0].mxu0
        %v919 = vpop.f32.mrb[0].mxu0
        %v920 = vadd.f32 %v753, %v919
        %v921 = vpop.f32.mrb[0].mxu0
        %922 = vdwg.mxu0
        %v923 = vmax.f32 %v861, 0.0
        %v924 = vmax.f32 %v864, 0.0
        %v925 = vmax.f32 %v869, 0.0
        %v926 = vmax.f32 %v872, 0.0
        %v927 = vmax.f32 %v877, 0.0
        %v928 = vmax.f32 %v880, 0.0
        %v929 = vmax.f32 %v885, 0.0
        %v930 = vmax.f32 %v888, 0.0
        %v931 = vmax.f32 %v893, 0.0
        %v932 = vmax.f32 %v896, 0.0
        %v933 = vmax.f32 %v901, 0.0
        %v934 = vmax.f32 %v904, 0.0
        %v935 = vmax.f32 %v909, 0.0
        %v936 = vmax.f32 %v912, 0.0
        %v937 = vmax.f32 %v917, 0.0
        %v938 = vmax.f32 %v920, 0.0
        %v939 = vpack.c.bf16 %v924, %v923
        %v940 = vpack.c.bf16 %v926, %v925
        %v941 = vpack.c.bf16 %v928, %v927
        %v942 = vpack.c.bf16 %v930, %v929
        %v943 = vpack.c.bf16 %v932, %v931
        %v944 = vpack.c.bf16 %v934, %v933
        %v945 = vpack.c.bf16 %v936, %v935
        %v946 = vpack.c.bf16 %v938, %v937
        %v947 = vld [vmem:[%s3] sm:$0xf]
        %v948 = vld [vmem:[%s3 + $0x4] sm:$0xf]
        %v949 = vld [vmem:[%s3 + $0x8] sm:$0xf]
        %v950 = vld [vmem:[%s3 + $0xc] sm:$0xf]
        %v951 = vld [vmem:[%s3 + $0x10] sm:$0xf]
        %v952 = vld [vmem:[%s3 + $0x14] sm:$0xf]
        %v953 = vld [vmem:[%s3 + $0x18] sm:$0xf]
        %v954 = vld [vmem:[%s3 + $0x1c] sm:$0xf]
        %v955 = vld [vmem:[#allocation5] sm:$0x1]
        %v957 = vlaneseq
        %v958 = vshrl.u32 %v957, 7
        %v959 = vsub.s32 0, %v958
        %v960 = vrot.slane %v955, %v959
        %v970 = vunpack.c.l.b16 %v947
        %v971 = vunpack.c.l.b16 %v948
        %v972 = vunpack.c.l.b16 %v949
        %v973 = vunpack.c.l.b16 %v950
        %v974 = vunpack.c.l.b16 %v951
        %v975 = vunpack.c.l.b16 %v952
        %v976 = vunpack.c.l.b16 %v953
        %v977 = vunpack.c.l.b16 %v954
        %v978 = vpack.c.b16 %v971, %v970
        %v979 = vpack.c.b16 %v973, %v972
        %v980 = vpack.c.b16 %v975, %v974
        %v981 = vpack.c.b16 %v977, %v976
        %vm986 = vcmask 523264
        %v988 = vsel %vm986, %v939, 0
        %v991 = vsel %vm986, %v940, 0
        %v994 = vsel %vm986, %v941, 0
        %v997 = vsel %vm986, %v942, 0
        %v1000 = vsel %vm986, %v943, 0
        %v1003 = vsel %vm986, %v944, 0
        %v1006 = vsel %vm986, %v945, 0
        %v1009 = vsel %vm986, %v946, 0
        %1011 = vmatprep.subr.bf16.mxu0 0
        %1012 = vmatpush1.bf16.msra.mxu0 %v978
        %1013 = vmatprep.subr.bf16.mxu0 0
        %1014 = vmatpush1.bf16.msra.mxu0 %v979
        %1015 = vmatprep.subr.bf16.mxu0 0
        %1016 = vmatpush1.bf16.msra.mxu0 %v980
        %1017 = vmatprep.subr.bf16.mxu0 0
        %1018 = vmatpush1.bf16.msra.mxu0 %v981
        %1019 = vmatprep.subr.bf16.mxu0 0
        %1020 = vmatpush1.bf16.msra.mxu0 0
        %1021 = vmatprep.subr.bf16.mxu0 0
        %1022 = vmatpush1.bf16.msra.mxu0 0
        %1023 = vmatprep.subr.bf16.mxu0 0
        %1024 = vmatpush1.bf16.msra.mxu0 0
        %1025 = vmatprep.subr.bf16.mxu0 0
        %1026 = vmatpush1.bf16.msra.mxu0 0
        %1027 = vmatprep.subr.bf16.mxu0 0
        %1028 = vmatpush1.bf16.msra.mxu0 0
        %1029 = vmatprep.subr.bf16.mxu0 0
        %1030 = vmatpush1.bf16.msra.mxu0 0
        %1031 = vmatprep.subr.bf16.mxu0 0
        %1032 = vmatpush1.bf16.msra.mxu0 0
        %1033 = vmatprep.subr.bf16.mxu0 0
        %1034 = vmatpush1.bf16.msra.mxu0 0
        %1035 = vmatprep.subr.bf16.mxu0 0
        %1036 = vmatpush1.bf16.msra.mxu0 0
        %1037 = vmatprep.subr.bf16.mxu0 0
        %1038 = vmatpush1.bf16.msra.mxu0 0
        %1039 = vmatprep.subr.bf16.mxu0 0
        %1040 = vmatpush1.bf16.msra.mxu0 0
        %1041 = vmatprep.subr.bf16.mxu0 0
        %1042 = vmatpush1.bf16.msra.mxu0 0
        %1043 = vmatprep.mubr.bf16.mxu0 0
        %1044 = vmatmul.mubr.bf16.gmra.mrb[0].mxu0 %v988
        %v1045 = vpop.f32.mrb[0].mxu0
        %v1046 = vadd.f32 %v960, %v1045
        %v1047 = vpop.f32.mrb[0].mxu0
        %v1048 = vpop.f32.mrb[0].mxu0
        %v1049 = vadd.f32 %v960, %v1048
        %v1050 = vpop.f32.mrb[0].mxu0
        %1051 = vmatprep.mubr.bf16.mxu0 0
        %1052 = vmatmul.mubr.bf16.gmra.mrb[0].mxu0 %v991
        %v1053 = vpop.f32.mrb[0].mxu0
        %v1054 = vadd.f32 %v960, %v1053
        %v1055 = vpop.f32.mrb[0].mxu0
        %v1056 = vpop.f32.mrb[0].mxu0
        %v1057 = vadd.f32 %v960, %v1056
        %v1058 = vpop.f32.mrb[0].mxu0
        %1059 = vmatprep.mubr.bf16.mxu0 0
        %1060 = vmatmul.mubr.bf16.gmra.mrb[0].mxu0 %v994
        %v1061 = vpop.f32.mrb[0].mxu0
        %v1062 = vadd.f32 %v960, %v1061
        %v1063 = vpop.f32.mrb[0].mxu0
        %v1064 = vpop.f32.mrb[0].mxu0
        %v1065 = vadd.f32 %v960, %v1064
        %v1066 = vpop.f32.mrb[0].mxu0
        %1067 = vmatprep.mubr.bf16.mxu0 0
        %1068 = vmatmul.mubr.bf16.gmra.mrb[0].mxu0 %v997
        %v1069 = vpop.f32.mrb[0].mxu0
        %v1070 = vadd.f32 %v960, %v1069
        %v1071 = vpop.f32.mrb[0].mxu0
        %v1072 = vpop.f32.mrb[0].mxu0
        %v1073 = vadd.f32 %v960, %v1072
        %v1074 = vpop.f32.mrb[0].mxu0
        %1075 = vmatprep.mubr.bf16.mxu0 0
        %1076 = vmatmul.mubr.bf16.gmra.mrb[0].mxu0 %v1000
        %v1077 = vpop.f32.mrb[0].mxu0
        %v1078 = vadd.f32 %v960, %v1077
        %v1079 = vpop.f32.mrb[0].mxu0
        %v1080 = vpop.f32.mrb[0].mxu0
        %v1081 = vadd.f32 %v960, %v1080
        %v1082 = vpop.f32.mrb[0].mxu0
        %1083 = vmatprep.mubr.bf16.mxu0 0
        %1084 = vmatmul.mubr.bf16.gmra.mrb[0].mxu0 %v1003
        %v1085 = vpop.f32.mrb[0].mxu0
        %v1086 = vadd.f32 %v960, %v1085
        %v1087 = vpop.f32.mrb[0].mxu0
        %v1088 = vpop.f32.mrb[0].mxu0
        %v1089 = vadd.f32 %v960, %v1088
        %v1090 = vpop.f32.mrb[0].mxu0
        %1091 = vmatprep.mubr.bf16.mxu0 0
        %1092 = vmatmul.mubr.bf16.gmra.mrb[0].mxu0 %v1006
        %v1093 = vpop.f32.mrb[0].mxu0
        %v1094 = vadd.f32 %v960, %v1093
        %v1095 = vpop.f32.mrb[0].mxu0
        %v1096 = vpop.f32.mrb[0].mxu0
        %v1097 = vadd.f32 %v960, %v1096
        %v1098 = vpop.f32.mrb[0].mxu0
        %1099 = vmatprep.mubr.bf16.mxu0 0
        %1100 = vmatmul.mubr.bf16.gmra.mrb[0].mxu0 %v1009
        %v1101 = vpop.f32.mrb[0].mxu0
        %v1102 = vadd.f32 %v960, %v1101
        %v1103 = vpop.f32.mrb[0].mxu0
        %v1104 = vpop.f32.mrb[0].mxu0
        %v1105 = vadd.f32 %v960, %v1104
        %v1106 = vpop.f32.mrb[0].mxu0
        %1107 = vdwg.mxu0
        %v1108 = vmax.f32 %v1046, 0.0
        %v1109 = vmax.f32 %v1049, 0.0
        %v1110 = vmax.f32 %v1054, 0.0
        %v1111 = vmax.f32 %v1057, 0.0
        %v1112 = vmax.f32 %v1062, 0.0
        %v1113 = vmax.f32 %v1065, 0.0
        %v1114 = vmax.f32 %v1070, 0.0
        %v1115 = vmax.f32 %v1073, 0.0
        %v1116 = vmax.f32 %v1078, 0.0
        %v1117 = vmax.f32 %v1081, 0.0
        %v1118 = vmax.f32 %v1086, 0.0
        %v1119 = vmax.f32 %v1089, 0.0
        %v1120 = vmax.f32 %v1094, 0.0
        %v1121 = vmax.f32 %v1097, 0.0
        %v1122 = vmax.f32 %v1102, 0.0
        %v1123 = vmax.f32 %v1105, 0.0
        %v1124 = vpack.c.bf16 %v1109, %v1108
        %v1125 = vpack.c.bf16 %v1111, %v1110
        %v1126 = vpack.c.bf16 %v1113, %v1112
        %v1127 = vpack.c.bf16 %v1115, %v1114
        %v1128 = vpack.c.bf16 %v1117, %v1116
        %v1129 = vpack.c.bf16 %v1119, %v1118
        %v1130 = vpack.c.bf16 %v1121, %v1120
        %v1131 = vpack.c.bf16 %v1123, %v1122
        %v1132 = vld [vmem:[%s5] sm:$0xf]
        %v1133 = vld [vmem:[%s5 + $0x4] sm:$0xf]
        %v1134 = vld [vmem:[%s5 + $0x8] sm:$0xf]
        %v1135 = vld [vmem:[%s5 + $0xc] sm:$0xf]
        %v1136 = vld [vmem:[%s5 + $0x10] sm:$0xf]
        %v1137 = vld [vmem:[%s5 + $0x14] sm:$0xf]
        %v1138 = vld [vmem:[%s5 + $0x18] sm:$0xf]
        %v1139 = vld [vmem:[%s5 + $0x1c] sm:$0xf]
        %v1140 = vld [vmem:[#allocation7] sm:$0x1]
        %v1142 = vlaneseq
        %v1143 = vshrl.u32 %v1142, 7
        %v1144 = vsub.s32 0, %v1143
        %v1145 = vrot.slane %v1140, %v1144
        %v1155 = vunpack.c.l.b16 %v1132
        %v1156 = vunpack.c.l.b16 %v1133
        %v1157 = vunpack.c.l.b16 %v1134
        %v1158 = vunpack.c.l.b16 %v1135
        %v1159 = vunpack.c.l.b16 %v1136
        %v1160 = vunpack.c.l.b16 %v1137
        %v1161 = vunpack.c.l.b16 %v1138
        %v1162 = vunpack.c.l.b16 %v1139
        %v1163 = vpack.c.b16 %v1156, %v1155
        %v1164 = vpack.c.b16 %v1158, %v1157
        %v1165 = vpack.c.b16 %v1160, %v1159
        %v1166 = vpack.c.b16 %v1162, %v1161
        %v1172 = vsel %vm986, %v1124, 0
        %v1175 = vsel %vm986, %v1125, 0
        %v1178 = vsel %vm986, %v1126, 0
        %v1181 = vsel %vm986, %v1127, 0
        %v1184 = vsel %vm986, %v1128, 0
        %v1187 = vsel %vm986, %v1129, 0
        %v1190 = vsel %vm986, %v1130, 0
        %v1193 = vsel %vm986, %v1131, 0
        %1195 = vmatprep.subr.bf16.mxu0 0
        %1196 = vmatpush1.bf16.msra.mxu0 %v1163
        %1197 = vmatprep.subr.bf16.mxu0 0
        %1198 = vmatpush1.bf16.msra.mxu0 %v1164
        %1199 = vmatprep.subr.bf16.mxu0 0
        %1200 = vmatpush1.bf16.msra.mxu0 %v1165
        %1201 = vmatprep.subr.bf16.mxu0 0
        %1202 = vmatpush1.bf16.msra.mxu0 %v1166
        %1203 = vmatprep.subr.bf16.mxu0 0
        %1204 = vmatpush1.bf16.msra.mxu0 0
        %1205 = vmatprep.subr.bf16.mxu0 0
        %1206 = vmatpush1.bf16.msra.mxu0 0
        %1207 = vmatprep.subr.bf16.mxu0 0
        %1208 = vmatpush1.bf16.msra.mxu0 0
        %1209 = vmatprep.subr.bf16.mxu0 0
        %1210 = vmatpush1.bf16.msra.mxu0 0
        %1211 = vmatprep.subr.bf16.mxu0 0
        %1212 = vmatpush1.bf16.msra.mxu0 0
        %1213 = vmatprep.subr.bf16.mxu0 0
        %1214 = vmatpush1.bf16.msra.mxu0 0
        %1215 = vmatprep.subr.bf16.mxu0 0
        %1216 = vmatpush1.bf16.msra.mxu0 0
        %1217 = vmatprep.subr.bf16.mxu0 0
        %1218 = vmatpush1.bf16.msra.mxu0 0
        %1219 = vmatprep.subr.bf16.mxu0 0
        %1220 = vmatpush1.bf16.msra.mxu0 0
        %1221 = vmatprep.subr.bf16.mxu0 0
        %1222 = vmatpush1.bf16.msra.mxu0 0
        %1223 = vmatprep.subr.bf16.mxu0 0
        %1224 = vmatpush1.bf16.msra.mxu0 0
        %1225 = vmatprep.subr.bf16.mxu0 0
        %1226 = vmatpush1.bf16.msra.mxu0 0
        %1227 = vmatprep.mubr.bf16.mxu0 0
        %1228 = vmatmul.mubr.bf16.gmra.mrb[0].mxu0 %v1172
        %v1229 = vpop.f32.mrb[0].mxu0
        %v1230 = vadd.f32 %v1145, %v1229
        %v1231 = vpop.f32.mrb[0].mxu0
        %v1232 = vpop.f32.mrb[0].mxu0
        %v1233 = vadd.f32 %v1145, %v1232
        %v1234 = vpop.f32.mrb[0].mxu0
        %1235 = vmatprep.mubr.bf16.mxu0 0
        %1236 = vmatmul.mubr.bf16.gmra.mrb[0].mxu0 %v1175
        %v1237 = vpop.f32.mrb[0].mxu0
        %v1238 = vadd.f32 %v1145, %v1237
        %v1239 = vpop.f32.mrb[0].mxu0
        %v1240 = vpop.f32.mrb[0].mxu0
        %v1241 = vadd.f32 %v1145, %v1240
        %v1242 = vpop.f32.mrb[0].mxu0
        %1243 = vmatprep.mubr.bf16.mxu0 0
        %1244 = vmatmul.mubr.bf16.gmra.mrb[0].mxu0 %v1178
        %v1245 = vpop.f32.mrb[0].mxu0
        %v1246 = vadd.f32 %v1145, %v1245
        %v1247 = vpop.f32.mrb[0].mxu0
        %v1248 = vpop.f32.mrb[0].mxu0
        %v1249 = vadd.f32 %v1145, %v1248
        %v1250 = vpop.f32.mrb[0].mxu0
        %1251 = vmatprep.mubr.bf16.mxu0 0
        %1252 = vmatmul.mubr.bf16.gmra.mrb[0].mxu0 %v1181
        %v1253 = vpop.f32.mrb[0].mxu0
        %v1254 = vadd.f32 %v1145, %v1253
        %v1255 = vpop.f32.mrb[0].mxu0
        %v1256 = vpop.f32.mrb[0].mxu0
        %v1257 = vadd.f32 %v1145, %v1256
        %v1258 = vpop.f32.mrb[0].mxu0
        %1259 = vmatprep.mubr.bf16.mxu0 0
        %1260 = vmatmul.mubr.bf16.gmra.mrb[0].mxu0 %v1184
        %v1261 = vpop.f32.mrb[0].mxu0
        %v1262 = vadd.f32 %v1145, %v1261
        %v1263 = vpop.f32.mrb[0].mxu0
        %v1264 = vpop.f32.mrb[0].mxu0
        %v1265 = vadd.f32 %v1145, %v1264
        %v1266 = vpop.f32.mrb[0].mxu0
        %1267 = vmatprep.mubr.bf16.mxu0 0
        %1268 = vmatmul.mubr.bf16.gmra.mrb[0].mxu0 %v1187
        %v1269 = vpop.f32.mrb[0].mxu0
        %v1270 = vadd.f32 %v1145, %v1269
        %v1271 = vpop.f32.mrb[0].mxu0
        %v1272 = vpop.f32.mrb[0].mxu0
        %v1273 = vadd.f32 %v1145, %v1272
        %v1274 = vpop.f32.mrb[0].mxu0
        %1275 = vmatprep.mubr.bf16.mxu0 0
        %1276 = vmatmul.mubr.bf16.gmra.mrb[0].mxu0 %v1190
        %v1277 = vpop.f32.mrb[0].mxu0
        %v1278 = vadd.f32 %v1145, %v1277
        %v1279 = vpop.f32.mrb[0].mxu0
        %v1280 = vpop.f32.mrb[0].mxu0
        %v1281 = vadd.f32 %v1145, %v1280
        %v1282 = vpop.f32.mrb[0].mxu0
        %1283 = vmatprep.mubr.bf16.mxu0 0
        %1284 = vmatmul.mubr.bf16.gmra.mrb[0].mxu0 %v1193
        %v1285 = vpop.f32.mrb[0].mxu0
        %v1286 = vadd.f32 %v1145, %v1285
        %v1287 = vpop.f32.mrb[0].mxu0
        %v1288 = vpop.f32.mrb[0].mxu0
        %v1289 = vadd.f32 %v1145, %v1288
        %v1290 = vpop.f32.mrb[0].mxu0
        %1291 = vdwg.mxu0
        %v1292 = vmax.f32 %v1230, 0.0
        %v1293 = vmax.f32 %v1233, 0.0
        %v1294 = vmax.f32 %v1238, 0.0
        %v1295 = vmax.f32 %v1241, 0.0
        %v1296 = vmax.f32 %v1246, 0.0
        %v1297 = vmax.f32 %v1249, 0.0
        %v1298 = vmax.f32 %v1254, 0.0
        %v1299 = vmax.f32 %v1257, 0.0
        %v1300 = vmax.f32 %v1262, 0.0
        %v1301 = vmax.f32 %v1265, 0.0
        %v1302 = vmax.f32 %v1270, 0.0
        %v1303 = vmax.f32 %v1273, 0.0
        %v1304 = vmax.f32 %v1278, 0.0
        %v1305 = vmax.f32 %v1281, 0.0
        %v1306 = vmax.f32 %v1286, 0.0
        %v1307 = vmax.f32 %v1289, 0.0
        %v1308 = vpack.c.bf16 %v1293, %v1292
        %v1309 = vpack.c.bf16 %v1295, %v1294
        %v1310 = vpack.c.bf16 %v1297, %v1296
        %v1311 = vpack.c.bf16 %v1299, %v1298
        %v1312 = vpack.c.bf16 %v1301, %v1300
        %v1313 = vpack.c.bf16 %v1303, %v1302
        %v1314 = vpack.c.bf16 %v1305, %v1304
        %v1315 = vpack.c.bf16 %v1307, %v1306
        %v1316 = vld [vmem:[%s7] sm:$0xf]
        %v1317 = vld [vmem:[%s7 + $0x4] sm:$0xf]
        %v1318 = vld [vmem:[%s7 + $0x8] sm:$0xf]
        %v1319 = vld [vmem:[%s7 + $0xc] sm:$0xf]
        %v1320 = vld [vmem:[%s7 + $0x10] sm:$0xf]
        %v1321 = vld [vmem:[%s7 + $0x14] sm:$0xf]
        %v1322 = vld [vmem:[%s7 + $0x18] sm:$0xf]
        %v1323 = vld [vmem:[%s7 + $0x1c] sm:$0xf]
        %v1324 = vld [vmem:[#allocation8] sm:$0x1]
        %v1326 = vlaneseq
        %v1327 = vshrl.u32 %v1326, 7
        %v1328 = vsub.s32 0, %v1327
        %v1329 = vrot.slane %v1324, %v1328
        %v1339 = vunpack.c.l.b16 %v1316
        %v1340 = vunpack.c.l.b16 %v1317
        %v1341 = vunpack.c.l.b16 %v1318
        %v1342 = vunpack.c.l.b16 %v1319
        %v1343 = vunpack.c.l.b16 %v1320
        %v1344 = vunpack.c.l.b16 %v1321
        %v1345 = vunpack.c.l.b16 %v1322
        %v1346 = vunpack.c.l.b16 %v1323
        %v1347 = vpack.c.b16 %v1340, %v1339
        %v1348 = vpack.c.b16 %v1342, %v1341
        %v1349 = vpack.c.b16 %v1344, %v1343
        %v1350 = vpack.c.b16 %v1346, %v1345
        %v1356 = vsel %vm986, %v1308, 0
        %v1359 = vsel %vm986, %v1309, 0
        %v1362 = vsel %vm986, %v1310, 0
        %v1365 = vsel %vm986, %v1311, 0
        %v1368 = vsel %vm986, %v1312, 0
        %v1371 = vsel %vm986, %v1313, 0
        %v1374 = vsel %vm986, %v1314, 0
        %v1377 = vsel %vm986, %v1315, 0
        %1379 = vmatprep.subr.bf16.mxu0 0
        %1380 = vmatpush1.bf16.msra.mxu0 %v1347
        %1381 = vmatprep.subr.bf16.mxu0 0
        %1382 = vmatpush1.bf16.msra.mxu0 %v1348
        %1383 = vmatprep.subr.bf16.mxu0 0
        %1384 = vmatpush1.bf16.msra.mxu0 %v1349
        %1385 = vmatprep.subr.bf16.mxu0 0
        %1386 = vmatpush1.bf16.msra.mxu0 %v1350
        %1387 = vmatprep.subr.bf16.mxu0 0
        %1388 = vmatpush1.bf16.msra.mxu0 0
        %1389 = vmatprep.subr.bf16.mxu0 0
        %1390 = vmatpush1.bf16.msra.mxu0 0
        %1391 = vmatprep.subr.bf16.mxu0 0
        %1392 = vmatpush1.bf16.msra.mxu0 0
        %1393 = vmatprep.subr.bf16.mxu0 0
        %1394 = vmatpush1.bf16.msra.mxu0 0
        %1395 = vmatprep.subr.bf16.mxu0 0
        %1396 = vmatpush1.bf16.msra.mxu0 0
        %1397 = vmatprep.subr.bf16.mxu0 0
        %1398 = vmatpush1.bf16.msra.mxu0 0
        %1399 = vmatprep.subr.bf16.mxu0 0
        %1400 = vmatpush1.bf16.msra.mxu0 0
        %1401 = vmatprep.subr.bf16.mxu0 0
        %1402 = vmatpush1.bf16.msra.mxu0 0
        %1403 = vmatprep.subr.bf16.mxu0 0
        %1404 = vmatpush1.bf16.msra.mxu0 0
        %1405 = vmatprep.subr.bf16.mxu0 0
        %1406 = vmatpush1.bf16.msra.mxu0 0
        %1407 = vmatprep.subr.bf16.mxu0 0
        %1408 = vmatpush1.bf16.msra.mxu0 0
        %1409 = vmatprep.subr.bf16.mxu0 0
        %1410 = vmatpush1.bf16.msra.mxu0 0
        %1411 = vmatprep.mubr.bf16.mxu0 0
        %1412 = vmatmul.mubr.bf16.gmra.mrb[0].mxu0 %v1356
        %v1413 = vpop.f32.mrb[0].mxu0
        %v1414 = vadd.f32 %v1329, %v1413
        %v1415 = vpop.f32.mrb[0].mxu0
        %v1416 = vpop.f32.mrb[0].mxu0
        %v1417 = vadd.f32 %v1329, %v1416
        %v1418 = vpop.f32.mrb[0].mxu0
        %1419 = vmatprep.mubr.bf16.mxu0 0
        %1420 = vmatmul.mubr.bf16.gmra.mrb[0].mxu0 %v1359
        %v1421 = vpop.f32.mrb[0].mxu0
        %v1422 = vadd.f32 %v1329, %v1421
        %v1423 = vpop.f32.mrb[0].mxu0
        %v1424 = vpop.f32.mrb[0].mxu0
        %v1425 = vadd.f32 %v1329, %v1424
        %v1426 = vpop.f32.mrb[0].mxu0
        %1427 = vmatprep.mubr.bf16.mxu0 0
        %1428 = vmatmul.mubr.bf16.gmra.mrb[0].mxu0 %v1362
        %v1429 = vpop.f32.mrb[0].mxu0
        %v1430 = vadd.f32 %v1329, %v1429
        %v1431 = vpop.f32.mrb[0].mxu0
        %v1432 = vpop.f32.mrb[0].mxu0
        %v1433 = vadd.f32 %v1329, %v1432
        %v1434 = vpop.f32.mrb[0].mxu0
        %1435 = vmatprep.mubr.bf16.mxu0 0
        %1436 = vmatmul.mubr.bf16.gmra.mrb[0].mxu0 %v1365
        %v1437 = vpop.f32.mrb[0].mxu0
        %v1438 = vadd.f32 %v1329, %v1437
        %v1439 = vpop.f32.mrb[0].mxu0
        %v1440 = vpop.f32.mrb[0].mxu0
        %v1441 = vadd.f32 %v1329, %v1440
        %v1442 = vpop.f32.mrb[0].mxu0
        %1443 = vmatprep.mubr.bf16.mxu0 0
        %1444 = vmatmul.mubr.bf16.gmra.mrb[0].mxu0 %v1368
        %v1445 = vpop.f32.mrb[0].mxu0
        %v1446 = vadd.f32 %v1329, %v1445
        %v1447 = vpop.f32.mrb[0].mxu0
        %v1448 = vpop.f32.mrb[0].mxu0
        %v1449 = vadd.f32 %v1329, %v1448
        %v1450 = vpop.f32.mrb[0].mxu0
        %1451 = vmatprep.mubr.bf16.mxu0 0
        %1452 = vmatmul.mubr.bf16.gmra.mrb[0].mxu0 %v1371
        %v1453 = vpop.f32.mrb[0].mxu0
        %v1454 = vadd.f32 %v1329, %v1453
        %v1455 = vpop.f32.mrb[0].mxu0
        %v1456 = vpop.f32.mrb[0].mxu0
        %v1457 = vadd.f32 %v1329, %v1456
        %v1458 = vpop.f32.mrb[0].mxu0
        %1459 = vmatprep.mubr.bf16.mxu0 0
        %1460 = vmatmul.mubr.bf16.gmra.mrb[0].mxu0 %v1374
        %v1461 = vpop.f32.mrb[0].mxu0
        %v1462 = vadd.f32 %v1329, %v1461
        %v1463 = vpop.f32.mrb[0].mxu0
        %v1464 = vpop.f32.mrb[0].mxu0
        %v1465 = vadd.f32 %v1329, %v1464
        %v1466 = vpop.f32.mrb[0].mxu0
        %1467 = vmatprep.mubr.bf16.mxu0 0
        %1468 = vmatmul.mubr.bf16.gmra.mrb[0].mxu0 %v1377
        %v1469 = vpop.f32.mrb[0].mxu0
        %v1470 = vadd.f32 %v1329, %v1469
        %v1471 = vpop.f32.mrb[0].mxu0
        %v1472 = vpop.f32.mrb[0].mxu0
        %v1473 = vadd.f32 %v1329, %v1472
        %v1474 = vpop.f32.mrb[0].mxu0
        %1475 = vdwg.mxu0
        %v1476 = vmax.f32 %v1414, 0.0
        %v1477 = vmax.f32 %v1417, 0.0
        %v1478 = vmax.f32 %v1422, 0.0
        %v1479 = vmax.f32 %v1425, 0.0
        %v1480 = vmax.f32 %v1430, 0.0
        %v1481 = vmax.f32 %v1433, 0.0
        %v1482 = vmax.f32 %v1438, 0.0
        %v1483 = vmax.f32 %v1441, 0.0
        %v1484 = vmax.f32 %v1446, 0.0
        %v1485 = vmax.f32 %v1449, 0.0
        %v1486 = vmax.f32 %v1454, 0.0
        %v1487 = vmax.f32 %v1457, 0.0
        %v1488 = vmax.f32 %v1462, 0.0
        %v1489 = vmax.f32 %v1465, 0.0
        %v1490 = vmax.f32 %v1470, 0.0
        %v1491 = vmax.f32 %v1473, 0.0
        %v1492 = vpack.c.bf16 %v1477, %v1476
        %v1493 = vpack.c.bf16 %v1479, %v1478
        %v1494 = vpack.c.bf16 %v1481, %v1480
        %v1495 = vpack.c.bf16 %v1483, %v1482
        %v1496 = vpack.c.bf16 %v1485, %v1484
        %v1497 = vpack.c.bf16 %v1487, %v1486
        %v1498 = vpack.c.bf16 %v1489, %v1488
        %v1499 = vpack.c.bf16 %v1491, %v1490
        %v1500 = vld [vmem:[#allocation10] sm:$0xf]
        %v1501 = vld [vmem:[#allocation10 + $0x4] sm:$0xf]
        %v1502 = vld [vmem:[%s10] sm:$0xf]
        %v1503 = vld [vmem:[%s10 + $0x4] sm:$0xf]
        %v1504 = vld [vmem:[%s10 + $0x8] sm:$0xf]
        %v1505 = vld [vmem:[%s10 + $0xc] sm:$0xf]
        %v1506 = vld [vmem:[%s10 + $0x10] sm:$0xf]
        %v1507 = vld [vmem:[%s10 + $0x14] sm:$0xf]
        %v1508 = vld [vmem:[%s10 + $0x18] sm:$0xf]
        %v1509 = vld [vmem:[%s10 + $0x1c] sm:$0xf]
        %v1510 = vld [vmem:[#allocation11] sm:$0x1]
        %v1519 = vunpack.c.l.b16 %v1502
        %v1520 = vunpack.c.l.b16 %v1503
        %v1521 = vunpack.c.l.b16 %v1504
        %v1522 = vunpack.c.l.b16 %v1505
        %v1523 = vunpack.c.l.b16 %v1506
        %v1524 = vunpack.c.l.b16 %v1507
        %v1525 = vunpack.c.l.b16 %v1508
        %v1526 = vunpack.c.l.b16 %v1509
        %v1527 = vpack.c.b16 %v1520, %v1519
        %v1528 = vpack.c.b16 %v1522, %v1521
        %v1529 = vpack.c.b16 %v1524, %v1523
        %v1530 = vpack.c.b16 %v1526, %v1525
        %v1536 = vsel %vm986, %v1492, 0
        %v1539 = vsel %vm986, %v1493, 0
        %v1542 = vsel %vm986, %v1494, 0
        %v1545 = vsel %vm986, %v1495, 0
        %v1548 = vsel %vm986, %v1496, 0
        %v1551 = vsel %vm986, %v1497, 0
        %v1554 = vsel %vm986, %v1498, 0
        %v1557 = vsel %vm986, %v1499, 0
        %1559 = vmatprep.subr.bf16.mxu0 0
        %1560 = vmatpush1.bf16.msra.mxu0 %v1527
        %1561 = vmatprep.subr.bf16.mxu0 0
        %1562 = vmatpush1.bf16.msra.mxu0 %v1528
        %1563 = vmatprep.subr.bf16.mxu0 0
        %1564 = vmatpush1.bf16.msra.mxu0 %v1529
        %1565 = vmatprep.subr.bf16.mxu0 0
        %1566 = vmatpush1.bf16.msra.mxu0 %v1530
        %1567 = vmatprep.subr.bf16.mxu0 0
        %1568 = vmatpush1.bf16.msra.mxu0 0
        %1569 = vmatprep.subr.bf16.mxu0 0
        %1570 = vmatpush1.bf16.msra.mxu0 0
        %1571 = vmatprep.subr.bf16.mxu0 0
        %1572 = vmatpush1.bf16.msra.mxu0 0
        %1573 = vmatprep.subr.bf16.mxu0 0
        %1574 = vmatpush1.bf16.msra.mxu0 0
        %1575 = vmatprep.subr.bf16.mxu0 0
        %1576 = vmatpush1.bf16.msra.mxu0 0
        %1577 = vmatprep.subr.bf16.mxu0 0
        %1578 = vmatpush1.bf16.msra.mxu0 0
        %1579 = vmatprep.subr.bf16.mxu0 0
        %1580 = vmatpush1.bf16.msra.mxu0 0
        %1581 = vmatprep.subr.bf16.mxu0 0
        %1582 = vmatpush1.bf16.msra.mxu0 0
        %1583 = vmatprep.subr.bf16.mxu0 0
        %1584 = vmatpush1.bf16.msra.mxu0 0
        %1585 = vmatprep.subr.bf16.mxu0 0
        %1586 = vmatpush1.bf16.msra.mxu0 0
        %1587 = vmatprep.subr.bf16.mxu0 0
        %1588 = vmatpush1.bf16.msra.mxu0 0
        %1589 = vmatprep.subr.bf16.mxu0 0
        %1590 = vmatpush1.bf16.msra.mxu0 0
        %1591 = vmatprep.mubr.bf16.mxu0 0
        %1592 = vmatmul.mubr.bf16.gmra.mrb[0].mxu0 %v1536
        %v1593 = vpop.f32.mrb[0].mxu0
        %v1594 = vadd.f32 0.0, %v1593
        %v1595 = vpop.f32.mrb[0].mxu0
        %v1596 = vpop.f32.mrb[0].mxu0
        %v1597 = vadd.f32 0.0, %v1596
        %v1598 = vpop.f32.mrb[0].mxu0
        %1599 = vmatprep.mubr.bf16.mxu0 0
        %1600 = vmatmul.mubr.bf16.gmra.mrb[0].mxu0 %v1539
        %v1601 = vpop.f32.mrb[0].mxu0
        %v1602 = vadd.f32 0.0, %v1601
        %v1603 = vpop.f32.mrb[0].mxu0
        %v1604 = vpop.f32.mrb[0].mxu0
        %v1605 = vadd.f32 0.0, %v1604
        %v1606 = vpop.f32.mrb[0].mxu0
        %1607 = vmatprep.mubr.bf16.mxu0 0
        %1608 = vmatmul.mubr.bf16.gmra.mrb[0].mxu0 %v1542
        %v1609 = vpop.f32.mrb[0].mxu0
        %v1610 = vadd.f32 0.0, %v1609
        %v1611 = vpop.f32.mrb[0].mxu0
        %v1612 = vpop.f32.mrb[0].mxu0
        %v1613 = vadd.f32 0.0, %v1612
        %v1614 = vpop.f32.mrb[0].mxu0
        %1615 = vmatprep.mubr.bf16.mxu0 0
        %1616 = vmatmul.mubr.bf16.gmra.mrb[0].mxu0 %v1545
        %v1617 = vpop.f32.mrb[0].mxu0
        %v1618 = vadd.f32 0.0, %v1617
        %v1619 = vpop.f32.mrb[0].mxu0
        %v1620 = vpop.f32.mrb[0].mxu0
        %v1621 = vadd.f32 0.0, %v1620
        %v1622 = vpop.f32.mrb[0].mxu0
        %1623 = vmatprep.mubr.bf16.mxu0 0
        %1624 = vmatmul.mubr.bf16.gmra.mrb[0].mxu0 %v1548
        %v1625 = vpop.f32.mrb[0].mxu0
        %v1626 = vadd.f32 0.0, %v1625
        %v1627 = vpop.f32.mrb[0].mxu0
        %v1628 = vpop.f32.mrb[0].mxu0
        %v1629 = vadd.f32 0.0, %v1628
        %v1630 = vpop.f32.mrb[0].mxu0
        %1631 = vmatprep.mubr.bf16.mxu0 0
        %1632 = vmatmul.mubr.bf16.gmra.mrb[0].mxu0 %v1551
        %v1633 = vpop.f32.mrb[0].mxu0
        %v1634 = vadd.f32 0.0, %v1633
        %v1635 = vpop.f32.mrb[0].mxu0
        %v1636 = vpop.f32.mrb[0].mxu0
        %v1637 = vadd.f32 0.0, %v1636
        %v1638 = vpop.f32.mrb[0].mxu0
        %1639 = vmatprep.mubr.bf16.mxu0 0
        %1640 = vmatmul.mubr.bf16.gmra.mrb[0].mxu0 %v1554
        %v1641 = vpop.f32.mrb[0].mxu0
        %v1642 = vadd.f32 0.0, %v1641
        %v1643 = vpop.f32.mrb[0].mxu0
        %v1644 = vpop.f32.mrb[0].mxu0
        %v1645 = vadd.f32 0.0, %v1644
        %v1646 = vpop.f32.mrb[0].mxu0
        %1647 = vmatprep.mubr.bf16.mxu0 0
        %1648 = vmatmul.mubr.bf16.gmra.mrb[0].mxu0 %v1557
        %v1649 = vpop.f32.mrb[0].mxu0
        %v1650 = vadd.f32 0.0, %v1649
        %v1651 = vpop.f32.mrb[0].mxu0
        %v1652 = vpop.f32.mrb[0].mxu0
        %v1653 = vadd.f32 0.0, %v1652
        %v1654 = vpop.f32.mrb[0].mxu0
        %1655 = vdwg.mxu0
        %v1658 = vunpack.c.l.b16 %v1500
        %v1659 = vunpack.c.l.b16 %v1501
        %v1660 = vpack.c.b16 %v1659, %v1658
        %1662 = vmatprep.subr.bf16.mxu0 0
        %1663 = vmatpush1.bf16.msra.mxu0 %v1660
        %1664 = vmatprep.subr.bf16.mxu0 0
        %1665 = vmatpush1.bf16.msra.mxu0 0
        %1666 = vmatprep.subr.bf16.mxu0 0
        %1667 = vmatpush1.bf16.msra.mxu0 0
        %1668 = vmatprep.subr.bf16.mxu0 0
        %1669 = vmatpush1.bf16.msra.mxu0 0
        %1670 = vmatprep.subr.bf16.mxu0 0
        %1671 = vmatpush1.bf16.msra.mxu0 0
        %1672 = vmatprep.subr.bf16.mxu0 0
        %1673 = vmatpush1.bf16.msra.mxu0 0
        %1674 = vmatprep.subr.bf16.mxu0 0
        %1675 = vmatpush1.bf16.msra.mxu0 0
        %1676 = vmatprep.subr.bf16.mxu0 0
        %1677 = vmatpush1.bf16.msra.mxu0 0
        %1678 = vmatprep.subr.bf16.mxu0 0
        %1679 = vmatpush1.bf16.msra.mxu0 0
        %1680 = vmatprep.subr.bf16.mxu0 0
        %1681 = vmatpush1.bf16.msra.mxu0 0
        %1682 = vmatprep.subr.bf16.mxu0 0
        %1683 = vmatpush1.bf16.msra.mxu0 0
        %1684 = vmatprep.subr.bf16.mxu0 0
        %1685 = vmatpush1.bf16.msra.mxu0 0
        %1686 = vmatprep.subr.bf16.mxu0 0
        %1687 = vmatpush1.bf16.msra.mxu0 0
        %1688 = vmatprep.subr.bf16.mxu0 0
        %1689 = vmatpush1.bf16.msra.mxu0 0
        %1690 = vmatprep.subr.bf16.mxu0 0
        %1691 = vmatpush1.bf16.msra.mxu0 0
        %1692 = vmatprep.subr.bf16.mxu0 0
        %1693 = vmatpush1.bf16.msra.mxu0 0
        %1694 = vmatprep.mubr.bf16.mxu0 0
        %1695 = vmatmul.mubr.bf16.gmra.mrb[0].mxu0 %v803
        %v1696 = vpop.f32.mrb[0].mxu0
        %v1697 = vadd.f32 %v1594, %v1696
        %v1698 = vpop.f32.mrb[0].mxu0
        %v1699 = vpop.f32.mrb[0].mxu0
        %v1700 = vadd.f32 %v1597, %v1699
        %v1701 = vpop.f32.mrb[0].mxu0
        %1702 = vmatprep.mubr.bf16.mxu0 0
        %1703 = vmatmul.mubr.bf16.gmra.mrb[0].mxu0 %v806
        %v1704 = vpop.f32.mrb[0].mxu0
        %v1705 = vadd.f32 %v1602, %v1704
        %v1706 = vpop.f32.mrb[0].mxu0
        %v1707 = vpop.f32.mrb[0].mxu0
        %v1708 = vadd.f32 %v1605, %v1707
        %v1709 = vpop.f32.mrb[0].mxu0
        %1710 = vmatprep.mubr.bf16.mxu0 0
        %1711 = vmatmul.mubr.bf16.gmra.mrb[0].mxu0 %v809
        %v1712 = vpop.f32.mrb[0].mxu0
        %v1713 = vadd.f32 %v1610, %v1712
        %v1714 = vpop.f32.mrb[0].mxu0
        %v1715 = vpop.f32.mrb[0].mxu0
        %v1716 = vadd.f32 %v1613, %v1715
        %v1717 = vpop.f32.mrb[0].mxu0
        %1718 = vmatprep.mubr.bf16.mxu0 0
        %1719 = vmatmul.mubr.bf16.gmra.mrb[0].mxu0 %v812
        %v1720 = vpop.f32.mrb[0].mxu0
        %v1721 = vadd.f32 %v1618, %v1720
        %v1722 = vpop.f32.mrb[0].mxu0
        %v1723 = vpop.f32.mrb[0].mxu0
        %v1724 = vadd.f32 %v1621, %v1723
        %v1725 = vpop.f32.mrb[0].mxu0
        %1726 = vmatprep.mubr.bf16.mxu0 0
        %1727 = vmatmul.mubr.bf16.gmra.mrb[0].mxu0 %v815
        %v1728 = vpop.f32.mrb[0].mxu0
        %v1729 = vadd.f32 %v1626, %v1728
        %v1730 = vpop.f32.mrb[0].mxu0
        %v1731 = vpop.f32.mrb[0].mxu0
        %v1732 = vadd.f32 %v1629, %v1731
        %v1733 = vpop.f32.mrb[0].mxu0
        %1734 = vmatprep.mubr.bf16.mxu0 0
        %1735 = vmatmul.mubr.bf16.gmra.mrb[0].mxu0 %v818
        %v1736 = vpop.f32.mrb[0].mxu0
        %v1737 = vadd.f32 %v1634, %v1736
        %v1738 = vpop.f32.mrb[0].mxu0
        %v1739 = vpop.f32.mrb[0].mxu0
        %v1740 = vadd.f32 %v1637, %v1739
        %v1741 = vpop.f32.mrb[0].mxu0
        %1742 = vmatprep.mubr.bf16.mxu0 0
        %1743 = vmatmul.mubr.bf16.gmra.mrb[0].mxu0 %v821
        %v1744 = vpop.f32.mrb[0].mxu0
        %v1745 = vadd.f32 %v1642, %v1744
        %v1746 = vpop.f32.mrb[0].mxu0
        %v1747 = vpop.f32.mrb[0].mxu0
        %v1748 = vadd.f32 %v1645, %v1747
        %v1749 = vpop.f32.mrb[0].mxu0
        %1750 = vmatprep.mubr.bf16.mxu0 0
        %1751 = vmatmul.mubr.bf16.gmra.mrb[0].mxu0 %v824
        %v1752 = vpop.f32.mrb[0].mxu0
        %v1753 = vadd.f32 %v1650, %v1752
        %v1754 = vpop.f32.mrb[0].mxu0
        %v1755 = vpop.f32.mrb[0].mxu0
        %v1756 = vadd.f32 %v1653, %v1755
        %v1757 = vpop.f32.mrb[0].mxu0
        %1758 = vdwg.mxu0
        %v1760 = vlaneseq
        %v1761 = vshrl.u32 %v1760, 7
        %v1762 = vsub.s32 0, %v1761
        %v1763 = vrot.slane %v1510, %v1762
        %v1765 = vadd.f32 %v1697, %v1763
        %v1766 = vadd.f32 %v1700, %v1763
        %v1767 = vadd.f32 %v1705, %v1763
        %v1768 = vadd.f32 %v1708, %v1763
        %v1769 = vadd.f32 %v1713, %v1763
        %v1770 = vadd.f32 %v1716, %v1763
        %v1771 = vadd.f32 %v1721, %v1763
        %v1772 = vadd.f32 %v1724, %v1763
        %v1773 = vadd.f32 %v1729, %v1763
        %v1774 = vadd.f32 %v1732, %v1763
        %v1775 = vadd.f32 %v1737, %v1763
        %v1776 = vadd.f32 %v1740, %v1763
        %v1777 = vadd.f32 %v1745, %v1763
        %v1778 = vadd.f32 %v1748, %v1763
        %v1779 = vadd.f32 %v1753, %v1763
        %v1780 = vadd.f32 %v1756, %v1763
        %v1781 = vmax.f32 %v1765, 0.0
        %v1782 = vmax.f32 %v1766, 0.0
        %v1783 = vmax.f32 %v1767, 0.0
        %v1784 = vmax.f32 %v1768, 0.0
        %v1785 = vmax.f32 %v1769, 0.0
        %v1786 = vmax.f32 %v1770, 0.0
        %v1787 = vmax.f32 %v1771, 0.0
        %v1788 = vmax.f32 %v1772, 0.0
        %v1789 = vmax.f32 %v1773, 0.0
        %v1790 = vmax.f32 %v1774, 0.0
        %v1791 = vmax.f32 %v1775, 0.0
        %v1792 = vmax.f32 %v1776, 0.0
        %v1793 = vmax.f32 %v1777, 0.0
        %v1794 = vmax.f32 %v1778, 0.0
        %v1795 = vmax.f32 %v1779, 0.0
        %v1796 = vmax.f32 %v1780, 0.0
        %v1797 = vpack.c.bf16 %v1782, %v1781
        %v1798 = vpack.c.bf16 %v1784, %v1783
        %v1799 = vpack.c.bf16 %v1786, %v1785
        %v1800 = vpack.c.bf16 %v1788, %v1787
        %v1801 = vpack.c.bf16 %v1790, %v1789
        %v1802 = vpack.c.bf16 %v1792, %v1791
        %v1803 = vpack.c.bf16 %v1794, %v1793
        %v1804 = vpack.c.bf16 %v1796, %v1795
        %v1805 = vld [vmem:[%s12] sm:$0xf]
        %v1806 = vld [vmem:[%s12 + $0x4] sm:$0xf]
        %v1807 = vld [vmem:[%s12 + $0x8] sm:$0xf]
        %v1808 = vld [vmem:[%s12 + $0xc] sm:$0xf]
        %v1809 = vld [vmem:[%s12 + $0x10] sm:$0xf]
        %v1810 = vld [vmem:[%s12 + $0x14] sm:$0xf]
        %v1811 = vld [vmem:[%s12 + $0x18] sm:$0xf]
        %v1812 = vld [vmem:[%s12 + $0x1c] sm:$0xf]
        %v1813 = vld [vmem:[%s13] sm:$0x1]
        %v1815 = vlaneseq
        %v1816 = vshrl.u32 %v1815, 7
        %v1817 = vsub.s32 0, %v1816
        %v1818 = vrot.slane %v1813, %v1817
        %v1828 = vunpack.c.l.b16 %v1805
        %v1829 = vunpack.c.l.b16 %v1806
        %v1830 = vunpack.c.l.b16 %v1807
        %v1831 = vunpack.c.l.b16 %v1808
        %v1832 = vunpack.c.l.b16 %v1809
        %v1833 = vunpack.c.l.b16 %v1810
        %v1834 = vunpack.c.l.b16 %v1811
        %v1835 = vunpack.c.l.b16 %v1812
        %v1836 = vpack.c.b16 %v1829, %v1828
        %v1837 = vpack.c.b16 %v1831, %v1830
        %v1838 = vpack.c.b16 %v1833, %v1832
        %v1839 = vpack.c.b16 %v1835, %v1834
        %v1845 = vsel %vm986, %v1797, 0
        %v1848 = vsel %vm986, %v1798, 0
        %v1851 = vsel %vm986, %v1799, 0
        %v1854 = vsel %vm986, %v1800, 0
        %v1857 = vsel %vm986, %v1801, 0
        %v1860 = vsel %vm986, %v1802, 0
        %v1863 = vsel %vm986, %v1803, 0
        %v1866 = vsel %vm986, %v1804, 0
        %1868 = vmatprep.subr.bf16.mxu0 0
        %1869 = vmatpush1.bf16.msra.mxu0 %v1836
        %1870 = vmatprep.subr.bf16.mxu0 0
        %1871 = vmatpush1.bf16.msra.mxu0 %v1837
        %1872 = vmatprep.subr.bf16.mxu0 0
        %1873 = vmatpush1.bf16.msra.mxu0 %v1838
        %1874 = vmatprep.subr.bf16.mxu0 0
        %1875 = vmatpush1.bf16.msra.mxu0 %v1839
        %1876 = vmatprep.subr.bf16.mxu0 0
        %1877 = vmatpush1.bf16.msra.mxu0 0
        %1878 = vmatprep.subr.bf16.mxu0 0
        %1879 = vmatpush1.bf16.msra.mxu0 0
        %1880 = vmatprep.subr.bf16.mxu0 0
        %1881 = vmatpush1.bf16.msra.mxu0 0
        %1882 = vmatprep.subr.bf16.mxu0 0
        %1883 = vmatpush1.bf16.msra.mxu0 0
        %1884 = vmatprep.subr.bf16.mxu0 0
        %1885 = vmatpush1.bf16.msra.mxu0 0
        %1886 = vmatprep.subr.bf16.mxu0 0
        %1887 = vmatpush1.bf16.msra.mxu0 0
        %1888 = vmatprep.subr.bf16.mxu0 0
        %1889 = vmatpush1.bf16.msra.mxu0 0
        %1890 = vmatprep.subr.bf16.mxu0 0
        %1891 = vmatpush1.bf16.msra.mxu0 0
        %1892 = vmatprep.subr.bf16.mxu0 0
        %1893 = vmatpush1.bf16.msra.mxu0 0
        %1894 = vmatprep.subr.bf16.mxu0 0
        %1895 = vmatpush1.bf16.msra.mxu0 0
        %1896 = vmatprep.subr.bf16.mxu0 0
        %1897 = vmatpush1.bf16.msra.mxu0 0
        %1898 = vmatprep.subr.bf16.mxu0 0
        %1899 = vmatpush1.bf16.msra.mxu0 0
        %1900 = vmatprep.mubr.bf16.mxu0 0
        %1901 = vmatmul.mubr.bf16.gmra.mrb[0].mxu0 %v1845
        %v1902 = vpop.f32.mrb[0].mxu0
        %v1903 = vadd.f32 %v1818, %v1902
        %v1904 = vpop.f32.mrb[0].mxu0
        %v1905 = vpop.f32.mrb[0].mxu0
        %v1906 = vadd.f32 %v1818, %v1905
        %v1907 = vpop.f32.mrb[0].mxu0
        %1908 = vmatprep.mubr.bf16.mxu0 0
        %1909 = vmatmul.mubr.bf16.gmra.mrb[0].mxu0 %v1848
        %v1910 = vpop.f32.mrb[0].mxu0
        %v1911 = vadd.f32 %v1818, %v1910
        %v1912 = vpop.f32.mrb[0].mxu0
        %v1913 = vpop.f32.mrb[0].mxu0
        %v1914 = vadd.f32 %v1818, %v1913
        %v1915 = vpop.f32.mrb[0].mxu0
        %1916 = vmatprep.mubr.bf16.mxu0 0
        %1917 = vmatmul.mubr.bf16.gmra.mrb[0].mxu0 %v1851
        %v1918 = vpop.f32.mrb[0].mxu0
        %v1919 = vadd.f32 %v1818, %v1918
        %v1920 = vpop.f32.mrb[0].mxu0
        %v1921 = vpop.f32.mrb[0].mxu0
        %v1922 = vadd.f32 %v1818, %v1921
        %v1923 = vpop.f32.mrb[0].mxu0
        %1924 = vmatprep.mubr.bf16.mxu0 0
        %1925 = vmatmul.mubr.bf16.gmra.mrb[0].mxu0 %v1854
        %v1926 = vpop.f32.mrb[0].mxu0
        %v1927 = vadd.f32 %v1818, %v1926
        %v1928 = vpop.f32.mrb[0].mxu0
        %v1929 = vpop.f32.mrb[0].mxu0
        %v1930 = vadd.f32 %v1818, %v1929
        %v1931 = vpop.f32.mrb[0].mxu0
        %1932 = vmatprep.mubr.bf16.mxu0 0
        %1933 = vmatmul.mubr.bf16.gmra.mrb[0].mxu0 %v1857
        %v1934 = vpop.f32.mrb[0].mxu0
        %v1935 = vadd.f32 %v1818, %v1934
        %v1936 = vpop.f32.mrb[0].mxu0
        %v1937 = vpop.f32.mrb[0].mxu0
        %v1938 = vadd.f32 %v1818, %v1937
        %v1939 = vpop.f32.mrb[0].mxu0
        %1940 = vmatprep.mubr.bf16.mxu0 0
        %1941 = vmatmul.mubr.bf16.gmra.mrb[0].mxu0 %v1860
        %v1942 = vpop.f32.mrb[0].mxu0
        %v1943 = vadd.f32 %v1818, %v1942
        %v1944 = vpop.f32.mrb[0].mxu0
        %v1945 = vpop.f32.mrb[0].mxu0
        %v1946 = vadd.f32 %v1818, %v1945
        %v1947 = vpop.f32.mrb[0].mxu0
        %1948 = vmatprep.mubr.bf16.mxu0 0
        %1949 = vmatmul.mubr.bf16.gmra.mrb[0].mxu0 %v1863
        %v1950 = vpop.f32.mrb[0].mxu0
        %v1951 = vadd.f32 %v1818, %v1950
        %v1952 = vpop.f32.mrb[0].mxu0
        %v1953 = vpop.f32.mrb[0].mxu0
        %v1954 = vadd.f32 %v1818, %v1953
        %v1955 = vpop.f32.mrb[0].mxu0
        %1956 = vmatprep.mubr.bf16.mxu0 0
        %1957 = vmatmul.mubr.bf16.gmra.mrb[0].mxu0 %v1866
        %v1958 = vpop.f32.mrb[0].mxu0
        %v1959 = vadd.f32 %v1818, %v1958
        %v1960 = vpop.f32.mrb[0].mxu0
        %v1961 = vpop.f32.mrb[0].mxu0
        %v1962 = vadd.f32 %v1818, %v1961
        %v1963 = vpop.f32.mrb[0].mxu0
        %1964 = vdwg.mxu0
        %v1965 = vmax.f32 %v1903, 0.0
        %v1966 = vmax.f32 %v1906, 0.0
        %v1967 = vmax.f32 %v1911, 0.0
        %v1968 = vmax.f32 %v1914, 0.0
        %v1969 = vmax.f32 %v1919, 0.0
        %v1970 = vmax.f32 %v1922, 0.0
        %v1971 = vmax.f32 %v1927, 0.0
        %v1972 = vmax.f32 %v1930, 0.0
        %v1973 = vmax.f32 %v1935, 0.0
        %v1974 = vmax.f32 %v1938, 0.0
        %v1975 = vmax.f32 %v1943, 0.0
        %v1976 = vmax.f32 %v1946, 0.0
        %v1977 = vmax.f32 %v1951, 0.0
        %v1978 = vmax.f32 %v1954, 0.0
        %v1979 = vmax.f32 %v1959, 0.0
        %v1980 = vmax.f32 %v1962, 0.0
        %v1981 = vpack.c.bf16 %v1966, %v1965
        %v1982 = vpack.c.bf16 %v1968, %v1967
        %v1983 = vpack.c.bf16 %v1970, %v1969
        %v1984 = vpack.c.bf16 %v1972, %v1971
        %v1985 = vpack.c.bf16 %v1974, %v1973
        %v1986 = vpack.c.bf16 %v1976, %v1975
        %v1987 = vpack.c.bf16 %v1978, %v1977
        %v1988 = vpack.c.bf16 %v1980, %v1979
        %v1989 = vld [vmem:[%s14] sm:$0xf]
        %v1990 = vld [vmem:[%s14 + $0x4] sm:$0xf]
        %v1991 = vld [vmem:[%s14 + $0x8] sm:$0xf]
        %v1992 = vld [vmem:[%s14 + $0xc] sm:$0xf]
        %v1993 = vld [vmem:[%s14 + $0x10] sm:$0xf]
        %v1994 = vld [vmem:[%s14 + $0x14] sm:$0xf]
        %v1995 = vld [vmem:[%s14 + $0x18] sm:$0xf]
        %v1996 = vld [vmem:[%s14 + $0x1c] sm:$0xf]
        %v1997 = vld [vmem:[%s15] sm:$0x1]
        %v1999 = vlaneseq
        %v2000 = vshrl.u32 %v1999, 7
        %v2001 = vsub.s32 0, %v2000
        %v2002 = vrot.slane %v1997, %v2001
        %v2012 = vunpack.c.l.b16 %v1989
        %v2013 = vunpack.c.l.b16 %v1990
        %v2014 = vunpack.c.l.b16 %v1991
        %v2015 = vunpack.c.l.b16 %v1992
        %v2016 = vunpack.c.l.b16 %v1993
        %v2017 = vunpack.c.l.b16 %v1994
        %v2018 = vunpack.c.l.b16 %v1995
        %v2019 = vunpack.c.l.b16 %v1996
        %v2020 = vpack.c.b16 %v2013, %v2012
        %v2021 = vpack.c.b16 %v2015, %v2014
        %v2022 = vpack.c.b16 %v2017, %v2016
        %v2023 = vpack.c.b16 %v2019, %v2018
        %v2029 = vsel %vm986, %v1981, 0
        %v2032 = vsel %vm986, %v1982, 0
        %v2035 = vsel %vm986, %v1983, 0
        %v2038 = vsel %vm986, %v1984, 0
        %v2041 = vsel %vm986, %v1985, 0
        %v2044 = vsel %vm986, %v1986, 0
        %v2047 = vsel %vm986, %v1987, 0
        %v2050 = vsel %vm986, %v1988, 0
        %2052 = vmatprep.subr.bf16.mxu0 0
        %2053 = vmatpush1.bf16.msra.mxu0 %v2020
        %2054 = vmatprep.subr.bf16.mxu0 0
        %2055 = vmatpush1.bf16.msra.mxu0 %v2021
        %2056 = vmatprep.subr.bf16.mxu0 0
        %2057 = vmatpush1.bf16.msra.mxu0 %v2022
        %2058 = vmatprep.subr.bf16.mxu0 0
        %2059 = vmatpush1.bf16.msra.mxu0 %v2023
        %2060 = vmatprep.subr.bf16.mxu0 0
        %2061 = vmatpush1.bf16.msra.mxu0 0
        %2062 = vmatprep.subr.bf16.mxu0 0
        %2063 = vmatpush1.bf16.msra.mxu0 0
        %2064 = vmatprep.subr.bf16.mxu0 0
        %2065 = vmatpush1.bf16.msra.mxu0 0
        %2066 = vmatprep.subr.bf16.mxu0 0
        %2067 = vmatpush1.bf16.msra.mxu0 0
        %2068 = vmatprep.subr.bf16.mxu0 0
        %2069 = vmatpush1.bf16.msra.mxu0 0
        %2070 = vmatprep.subr.bf16.mxu0 0
        %2071 = vmatpush1.bf16.msra.mxu0 0
        %2072 = vmatprep.subr.bf16.mxu0 0
        %2073 = vmatpush1.bf16.msra.mxu0 0
        %2074 = vmatprep.subr.bf16.mxu0 0
        %2075 = vmatpush1.bf16.msra.mxu0 0
        %2076 = vmatprep.subr.bf16.mxu0 0
        %2077 = vmatpush1.bf16.msra.mxu0 0
        %2078 = vmatprep.subr.bf16.mxu0 0
        %2079 = vmatpush1.bf16.msra.mxu0 0
        %2080 = vmatprep.subr.bf16.mxu0 0
        %2081 = vmatpush1.bf16.msra.mxu0 0
        %2082 = vmatprep.subr.bf16.mxu0 0
        %2083 = vmatpush1.bf16.msra.mxu0 0
        %2084 = vmatprep.mubr.bf16.mxu0 0
        %2085 = vmatmul.mubr.bf16.gmra.mrb[0].mxu0 %v2029
        %v2086 = vpop.f32.mrb[0].mxu0
        %v2087 = vadd.f32 %v2002, %v2086
        %v2088 = vpop.f32.mrb[0].mxu0
        %v2089 = vpop.f32.mrb[0].mxu0
        %v2090 = vadd.f32 %v2002, %v2089
        %v2091 = vpop.f32.mrb[0].mxu0
        %2092 = vmatprep.mubr.bf16.mxu0 0
        %2093 = vmatmul.mubr.bf16.gmra.mrb[0].mxu0 %v2032
        %v2094 = vpop.f32.mrb[0].mxu0
        %v2095 = vadd.f32 %v2002, %v2094
        %v2096 = vpop.f32.mrb[0].mxu0
        %v2097 = vpop.f32.mrb[0].mxu0
        %v2098 = vadd.f32 %v2002, %v2097
        %v2099 = vpop.f32.mrb[0].mxu0
        %2100 = vmatprep.mubr.bf16.mxu0 0
        %2101 = vmatmul.mubr.bf16.gmra.mrb[0].mxu0 %v2035
        %v2102 = vpop.f32.mrb[0].mxu0
        %v2103 = vadd.f32 %v2002, %v2102
        %v2104 = vpop.f32.mrb[0].mxu0
        %v2105 = vpop.f32.mrb[0].mxu0
        %v2106 = vadd.f32 %v2002, %v2105
        %v2107 = vpop.f32.mrb[0].mxu0
        %2108 = vmatprep.mubr.bf16.mxu0 0
        %2109 = vmatmul.mubr.bf16.gmra.mrb[0].mxu0 %v2038
        %v2110 = vpop.f32.mrb[0].mxu0
        %v2111 = vadd.f32 %v2002, %v2110
        %v2112 = vpop.f32.mrb[0].mxu0
        %v2113 = vpop.f32.mrb[0].mxu0
        %v2114 = vadd.f32 %v2002, %v2113
        %v2115 = vpop.f32.mrb[0].mxu0
        %2116 = vmatprep.mubr.bf16.mxu0 0
        %2117 = vmatmul.mubr.bf16.gmra.mrb[0].mxu0 %v2041
        %v2118 = vpop.f32.mrb[0].mxu0
        %v2119 = vadd.f32 %v2002, %v2118
        %v2120 = vpop.f32.mrb[0].mxu0
        %v2121 = vpop.f32.mrb[0].mxu0
        %v2122 = vadd.f32 %v2002, %v2121
        %v2123 = vpop.f32.mrb[0].mxu0
        %2124 = vmatprep.mubr.bf16.mxu0 0
        %2125 = vmatmul.mubr.bf16.gmra.mrb[0].mxu0 %v2044
        %v2126 = vpop.f32.mrb[0].mxu0
        %v2127 = vadd.f32 %v2002, %v2126
        %v2128 = vpop.f32.mrb[0].mxu0
        %v2129 = vpop.f32.mrb[0].mxu0
        %v2130 = vadd.f32 %v2002, %v2129
        %v2131 = vpop.f32.mrb[0].mxu0
        %2132 = vmatprep.mubr.bf16.mxu0 0
        %2133 = vmatmul.mubr.bf16.gmra.mrb[0].mxu0 %v2047
        %v2134 = vpop.f32.mrb[0].mxu0
        %v2135 = vadd.f32 %v2002, %v2134
        %v2136 = vpop.f32.mrb[0].mxu0
        %v2137 = vpop.f32.mrb[0].mxu0
        %v2138 = vadd.f32 %v2002, %v2137
        %v2139 = vpop.f32.mrb[0].mxu0
        %2140 = vmatprep.mubr.bf16.mxu0 0
        %2141 = vmatmul.mubr.bf16.gmra.mrb[0].mxu0 %v2050
        %v2142 = vpop.f32.mrb[0].mxu0
        %v2143 = vadd.f32 %v2002, %v2142
        %v2144 = vpop.f32.mrb[0].mxu0
        %v2145 = vpop.f32.mrb[0].mxu0
        %v2146 = vadd.f32 %v2002, %v2145
        %v2147 = vpop.f32.mrb[0].mxu0
        %2148 = vdwg.mxu0
        %v2149 = vmax.f32 %v2087, 0.0
        %v2150 = vmax.f32 %v2090, 0.0
        %v2151 = vmax.f32 %v2095, 0.0
        %v2152 = vmax.f32 %v2098, 0.0
        %v2153 = vmax.f32 %v2103, 0.0
        %v2154 = vmax.f32 %v2106, 0.0
        %v2155 = vmax.f32 %v2111, 0.0
        %v2156 = vmax.f32 %v2114, 0.0
        %v2157 = vmax.f32 %v2119, 0.0
        %v2158 = vmax.f32 %v2122, 0.0
        %v2159 = vmax.f32 %v2127, 0.0
        %v2160 = vmax.f32 %v2130, 0.0
        %v2161 = vmax.f32 %v2135, 0.0
        %v2162 = vmax.f32 %v2138, 0.0
        %v2163 = vmax.f32 %v2143, 0.0
        %v2164 = vmax.f32 %v2146, 0.0
        %v2165 = vpack.c.bf16 %v2150, %v2149
        %v2166 = vpack.c.bf16 %v2152, %v2151
        %v2167 = vpack.c.bf16 %v2154, %v2153
        %v2168 = vpack.c.bf16 %v2156, %v2155
        %v2169 = vpack.c.bf16 %v2158, %v2157
        %v2170 = vpack.c.bf16 %v2160, %v2159
        %v2171 = vpack.c.bf16 %v2162, %v2161
        %v2172 = vpack.c.bf16 %v2164, %v2163
        %v2173 = vld [vmem:[#allocation13] sm:$0xf]
        %v2174 = vld [vmem:[#allocation13 + $0x4] sm:$0xf]
        %v2175 = vld [vmem:[#allocation13 + $0x8] sm:$0xf]
        %v2176 = vld [vmem:[#allocation13 + $0xc] sm:$0xf]
        %v2177 = vld [vmem:[#allocation13 + $0x10] sm:$0xf]
        %v2178 = vld [vmem:[#allocation13 + $0x14] sm:$0xf]
        %v2179 = vld [vmem:[#allocation13 + $0x18] sm:$0xf]
        %v2180 = vld [vmem:[#allocation13 + $0x1c] sm:$0xf]
        %v2181 = vld [vmem:[%s17] sm:$0x1]
        %v2183 = vlaneseq
        %v2184 = vshrl.u32 %v2183, 7
        %v2185 = vsub.s32 0, %v2184
        %v2186 = vrot.slane %v2181, %v2185
        %v2196 = vunpack.c.l.b16 %v2173
        %v2197 = vunpack.c.l.b16 %v2174
        %v2198 = vunpack.c.l.b16 %v2175
        %v2199 = vunpack.c.l.b16 %v2176
        %v2200 = vunpack.c.l.b16 %v2177
        %v2201 = vunpack.c.l.b16 %v2178
        %v2202 = vunpack.c.l.b16 %v2179
        %v2203 = vunpack.c.l.b16 %v2180
        %v2204 = vpack.c.b16 %v2197, %v2196
        %v2205 = vpack.c.b16 %v2199, %v2198
        %v2206 = vpack.c.b16 %v2201, %v2200
        %v2207 = vpack.c.b16 %v2203, %v2202
        %v2213 = vsel %vm986, %v2165, 0
        %v2216 = vsel %vm986, %v2166, 0
        %v2219 = vsel %vm986, %v2167, 0
        %v2222 = vsel %vm986, %v2168, 0
        %v2225 = vsel %vm986, %v2169, 0
        %v2228 = vsel %vm986, %v2170, 0
        %v2231 = vsel %vm986, %v2171, 0
        %v2234 = vsel %vm986, %v2172, 0
        %2236 = vmatprep.subr.bf16.mxu0 0
        %2237 = vmatpush1.bf16.msra.mxu0 %v2204
        %2238 = vmatprep.subr.bf16.mxu0 0
        %2239 = vmatpush1.bf16.msra.mxu0 %v2205
        %2240 = vmatprep.subr.bf16.mxu0 0
        %2241 = vmatpush1.bf16.msra.mxu0 %v2206
        %2242 = vmatprep.subr.bf16.mxu0 0
        %2243 = vmatpush1.bf16.msra.mxu0 %v2207
        %2244 = vmatprep.subr.bf16.mxu0 0
        %2245 = vmatpush1.bf16.msra.mxu0 0
        %2246 = vmatprep.subr.bf16.mxu0 0
        %2247 = vmatpush1.bf16.msra.mxu0 0
        %2248 = vmatprep.subr.bf16.mxu0 0
        %2249 = vmatpush1.bf16.msra.mxu0 0
        %2250 = vmatprep.subr.bf16.mxu0 0
        %2251 = vmatpush1.bf16.msra.mxu0 0
        %2252 = vmatprep.subr.bf16.mxu0 0
        %2253 = vmatpush1.bf16.msra.mxu0 0
        %2254 = vmatprep.subr.bf16.mxu0 0
        %2255 = vmatpush1.bf16.msra.mxu0 0
        %2256 = vmatprep.subr.bf16.mxu0 0
        %2257 = vmatpush1.bf16.msra.mxu0 0
        %2258 = vmatprep.subr.bf16.mxu0 0
        %2259 = vmatpush1.bf16.msra.mxu0 0
        %2260 = vmatprep.subr.bf16.mxu0 0
        %2261 = vmatpush1.bf16.msra.mxu0 0
        %2262 = vmatprep.subr.bf16.mxu0 0
        %2263 = vmatpush1.bf16.msra.mxu0 0
        %2264 = vmatprep.subr.bf16.mxu0 0
        %2265 = vmatpush1.bf16.msra.mxu0 0
        %2266 = vmatprep.subr.bf16.mxu0 0
        %2267 = vmatpush1.bf16.msra.mxu0 0
        %2268 = vmatprep.mubr.bf16.mxu0 0
        %2269 = vmatmul.mubr.bf16.gmra.mrb[0].mxu0 %v2213
        %v2270 = vpop.f32.mrb[0].mxu0
        %v2271 = vadd.f32 %v2186, %v2270
        %v2272 = vpop.f32.mrb[0].mxu0
        %v2273 = vpop.f32.mrb[0].mxu0
        %v2274 = vadd.f32 %v2186, %v2273
        %v2275 = vpop.f32.mrb[0].mxu0
        %2276 = vmatprep.mubr.bf16.mxu0 0
        %2277 = vmatmul.mubr.bf16.gmra.mrb[0].mxu0 %v2216
        %v2278 = vpop.f32.mrb[0].mxu0
        %v2279 = vadd.f32 %v2186, %v2278
        %v2280 = vpop.f32.mrb[0].mxu0
        %v2281 = vpop.f32.mrb[0].mxu0
        %v2282 = vadd.f32 %v2186, %v2281
        %v2283 = vpop.f32.mrb[0].mxu0
        %2284 = vmatprep.mubr.bf16.mxu0 0
        %2285 = vmatmul.mubr.bf16.gmra.mrb[0].mxu0 %v2219
        %v2286 = vpop.f32.mrb[0].mxu0
        %v2287 = vadd.f32 %v2186, %v2286
        %v2288 = vpop.f32.mrb[0].mxu0
        %v2289 = vpop.f32.mrb[0].mxu0
        %v2290 = vadd.f32 %v2186, %v2289
        %v2291 = vpop.f32.mrb[0].mxu0
        %2292 = vmatprep.mubr.bf16.mxu0 0
        %2293 = vmatmul.mubr.bf16.gmra.mrb[0].mxu0 %v2222
        %v2294 = vpop.f32.mrb[0].mxu0
        %v2295 = vadd.f32 %v2186, %v2294
        %v2296 = vpop.f32.mrb[0].mxu0
        %v2297 = vpop.f32.mrb[0].mxu0
        %v2298 = vadd.f32 %v2186, %v2297
        %v2299 = vpop.f32.mrb[0].mxu0
        %2300 = vmatprep.mubr.bf16.mxu0 0
        %2301 = vmatmul.mubr.bf16.gmra.mrb[0].mxu0 %v2225
        %v2302 = vpop.f32.mrb[0].mxu0
        %v2303 = vadd.f32 %v2186, %v2302
        %v2304 = vpop.f32.mrb[0].mxu0
        %v2305 = vpop.f32.mrb[0].mxu0
        %v2306 = vadd.f32 %v2186, %v2305
        %v2307 = vpop.f32.mrb[0].mxu0
        %2308 = vmatprep.mubr.bf16.mxu0 0
        %2309 = vmatmul.mubr.bf16.gmra.mrb[0].mxu0 %v2228
        %v2310 = vpop.f32.mrb[0].mxu0
        %v2311 = vadd.f32 %v2186, %v2310
        %v2312 = vpop.f32.mrb[0].mxu0
        %v2313 = vpop.f32.mrb[0].mxu0
        %v2314 = vadd.f32 %v2186, %v2313
        %v2315 = vpop.f32.mrb[0].mxu0
        %2316 = vmatprep.mubr.bf16.mxu0 0
        %2317 = vmatmul.mubr.bf16.gmra.mrb[0].mxu0 %v2231
        %v2318 = vpop.f32.mrb[0].mxu0
        %v2319 = vadd.f32 %v2186, %v2318
        %v2320 = vpop.f32.mrb[0].mxu0
        %v2321 = vpop.f32.mrb[0].mxu0
        %v2322 = vadd.f32 %v2186, %v2321
        %v2323 = vpop.f32.mrb[0].mxu0
        %2324 = vmatprep.mubr.bf16.mxu0 0
        %2325 = vmatmul.mubr.bf16.gmra.mrb[0].mxu0 %v2234
        %v2326 = vpop.f32.mrb[0].mxu0
        %v2327 = vadd.f32 %v2186, %v2326
        %v2328 = vpop.f32.mrb[0].mxu0
        %v2329 = vpop.f32.mrb[0].mxu0
        %v2330 = vadd.f32 %v2186, %v2329
        %v2331 = vpop.f32.mrb[0].mxu0
        %2332 = vdwg.mxu0
        %v2333 = vmax.f32 %v2271, 0.0
        %v2334 = vmax.f32 %v2274, 0.0
        %v2335 = vmax.f32 %v2279, 0.0
        %v2336 = vmax.f32 %v2282, 0.0
        %v2337 = vmax.f32 %v2287, 0.0
        %v2338 = vmax.f32 %v2290, 0.0
        %v2339 = vmax.f32 %v2295, 0.0
        %v2340 = vmax.f32 %v2298, 0.0
        %v2341 = vmax.f32 %v2303, 0.0
        %v2342 = vmax.f32 %v2306, 0.0
        %v2343 = vmax.f32 %v2311, 0.0
        %v2344 = vmax.f32 %v2314, 0.0
        %v2345 = vmax.f32 %v2319, 0.0
        %v2346 = vmax.f32 %v2322, 0.0
        %v2347 = vmax.f32 %v2327, 0.0
        %v2348 = vmax.f32 %v2330, 0.0
        %v2349 = vpack.c.bf16 %v2334, %v2333
        %v2350 = vpack.c.bf16 %v2336, %v2335
        %v2351 = vpack.c.bf16 %v2338, %v2337
        %v2352 = vpack.c.bf16 %v2340, %v2339
        %v2353 = vpack.c.bf16 %v2342, %v2341
        %v2354 = vpack.c.bf16 %v2344, %v2343
        %v2355 = vpack.c.bf16 %v2346, %v2345
        %v2356 = vpack.c.bf16 %v2348, %v2347
        %v2357 = vld [vmem:[%s18] sm:$0x1]
        %v2358 = vld [vmem:[#allocation2] sm:$0x1]
        %v2359 = vunpack.c.l.bf16 %v2349
        %v2360 = vunpack.c.h.bf16 %v2349
        %v2361 = vunpack.c.l.bf16 %v2350
        %v2362 = vunpack.c.h.bf16 %v2350
        %v2363 = vunpack.c.l.bf16 %v2351
        %v2364 = vunpack.c.h.bf16 %v2351
        %v2365 = vunpack.c.l.bf16 %v2352
        %v2366 = vunpack.c.h.bf16 %v2352
        %v2367 = vunpack.c.l.bf16 %v2353
        %v2368 = vunpack.c.h.bf16 %v2353
        %v2369 = vunpack.c.l.bf16 %v2354
        %v2370 = vunpack.c.h.bf16 %v2354
        %v2371 = vunpack.c.l.bf16 %v2355
        %v2372 = vunpack.c.h.bf16 %v2355
        %v2373 = vunpack.c.l.bf16 %v2356
        %v2374 = vunpack.c.h.bf16 %v2356
        %v2376 = vlaneseq
        %v2377 = vshrl.u32 %v2376, 7
        %v2378 = vsub.s32 0, %v2377
        %v2379 = vrot.slane %v2357, %v2378
        %v2381 = vmul.f32 %v2359, %v2379
        %v2382 = vmul.f32 %v2360, %v2379
        %v2383 = vmul.f32 %v2361, %v2379
        %v2384 = vmul.f32 %v2362, %v2379
        %v2385 = vmul.f32 %v2363, %v2379
        %v2386 = vmul.f32 %v2364, %v2379
        %v2387 = vmul.f32 %v2365, %v2379
        %v2388 = vmul.f32 %v2366, %v2379
        %v2389 = vmul.f32 %v2367, %v2379
        %v2390 = vmul.f32 %v2368, %v2379
        %v2391 = vmul.f32 %v2369, %v2379
        %v2392 = vmul.f32 %v2370, %v2379
        %v2393 = vmul.f32 %v2371, %v2379
        %v2394 = vmul.f32 %v2372, %v2379
        %v2395 = vmul.f32 %v2373, %v2379
        %v2396 = vmul.f32 %v2374, %v2379
        %v2397 = vsel %vm986, %v2381, 0.0
        %2398 = vadd.xlane.f32.xlu0 %v2397
        %v2399 = vpop.xlane.xlu0 %2398
        %v2400 = vsel %vm986, %v2382, 0.0
        %2401 = vadd.xlane.f32.xlu0 %v2400
        %v2402 = vpop.xlane.xlu0 %2401
        %v2403 = vsel %vm986, %v2383, 0.0
        %2404 = vadd.xlane.f32.xlu0 %v2403
        %v2405 = vpop.xlane.xlu0 %2404
        %v2406 = vsel %vm986, %v2384, 0.0
        %2407 = vadd.xlane.f32.xlu0 %v2406
        %v2408 = vpop.xlane.xlu0 %2407
        %v2409 = vsel %vm986, %v2385, 0.0
        %2410 = vadd.xlane.f32.xlu0 %v2409
        %v2411 = vpop.xlane.xlu0 %2410
        %v2412 = vsel %vm986, %v2386, 0.0
        %2413 = vadd.xlane.f32.xlu0 %v2412
        %v2414 = vpop.xlane.xlu0 %2413
        %v2415 = vsel %vm986, %v2387, 0.0
        %2416 = vadd.xlane.f32.xlu0 %v2415
        %v2417 = vpop.xlane.xlu0 %2416
        %v2418 = vsel %vm986, %v2388, 0.0
        %2419 = vadd.xlane.f32.xlu0 %v2418
        %v2420 = vpop.xlane.xlu0 %2419
        %v2421 = vsel %vm986, %v2389, 0.0
        %2422 = vadd.xlane.f32.xlu0 %v2421
        %v2423 = vpop.xlane.xlu0 %2422
        %v2424 = vsel %vm986, %v2390, 0.0
        %2425 = vadd.xlane.f32.xlu0 %v2424
        %v2426 = vpop.xlane.xlu0 %2425
        %v2427 = vsel %vm986, %v2391, 0.0
        %2428 = vadd.xlane.f32.xlu0 %v2427
        %v2429 = vpop.xlane.xlu0 %2428
        %v2430 = vsel %vm986, %v2392, 0.0
        %2431 = vadd.xlane.f32.xlu0 %v2430
        %v2432 = vpop.xlane.xlu0 %2431
        %v2433 = vsel %vm986, %v2393, 0.0
        %2434 = vadd.xlane.f32.xlu0 %v2433
        %v2435 = vpop.xlane.xlu0 %2434
        %v2436 = vsel %vm986, %v2394, 0.0
        %2437 = vadd.xlane.f32.xlu0 %v2436
        %v2438 = vpop.xlane.xlu0 %2437
        %v2439 = vsel %vm986, %v2395, 0.0
        %2440 = vadd.xlane.f32.xlu0 %v2439
        %v2441 = vpop.xlane.xlu0 %2440
        %v2442 = vsel %vm986, %v2396, 0.0
        %2443 = vadd.xlane.f32.xlu0 %v2442
        %v2444 = vpop.xlane.xlu0 %2443
        %v2446 = vlaneseq
        %v2447 = vshrl.u32 %v2446, 7
        %v2448 = vsub.s32 0, %v2447
        %v2449 = vrot.slane %v2358, %v2448
        %v2451 = vadd.f32 %v2399, %v2449
        %v2452 = vadd.f32 %v2402, %v2449
        %v2453 = vadd.f32 %v2405, %v2449
        %v2454 = vadd.f32 %v2408, %v2449
        %v2455 = vadd.f32 %v2411, %v2449
        %v2456 = vadd.f32 %v2414, %v2449
        %v2457 = vadd.f32 %v2417, %v2449
        %v2458 = vadd.f32 %v2420, %v2449
        %v2459 = vadd.f32 %v2423, %v2449
        %v2460 = vadd.f32 %v2426, %v2449
        %v2461 = vadd.f32 %v2429, %v2449
        %v2462 = vadd.f32 %v2432, %v2449
        %v2463 = vadd.f32 %v2435, %v2449
        %v2464 = vadd.f32 %v2438, %v2449
        %v2465 = vadd.f32 %v2441, %v2449
        %v2466 = vadd.f32 %v2444, %v2449
        %vm2467 = vcmask 7168
        %2468 = vst.msk [vmem:[%s727] sm:$0xff] %vm2467, %v2451
        %2469 = vst.msk [vmem:[%s727 + $0x8] sm:$0xff] %vm2467, %v2452
        %2470 = vst.msk [vmem:[%s727 + $0x10] sm:$0xff] %vm2467, %v2453
        %2471 = vst.msk [vmem:[%s727 + $0x18] sm:$0xff] %vm2467, %v2454
        %2472 = vst.msk [vmem:[%s727 + $0x20] sm:$0xff] %vm2467, %v2455
        %2473 = vst.msk [vmem:[%s727 + $0x28] sm:$0xff] %vm2467, %v2456
        %2474 = vst.msk [vmem:[%s727 + $0x30] sm:$0xff] %vm2467, %v2457
        %2475 = vst.msk [vmem:[%s727 + $0x38] sm:$0xff] %vm2467, %v2458
        %2476 = vst.msk [vmem:[%s727 + $0x40] sm:$0xff] %vm2467, %v2459
        %2477 = vst.msk [vmem:[%s727 + $0x48] sm:$0xff] %vm2467, %v2460
        %2478 = vst.msk [vmem:[%s727 + $0x50] sm:$0xff] %vm2467, %v2461
        %2479 = vst.msk [vmem:[%s727 + $0x58] sm:$0xff] %vm2467, %v2462
        %2480 = vst.msk [vmem:[%s727 + $0x60] sm:$0xff] %vm2467, %v2463
        %2481 = vst.msk [vmem:[%s727 + $0x68] sm:$0xff] %vm2467, %v2464
        %2482 = vst.msk [vmem:[%s727 + $0x70] sm:$0xff] %vm2467, %v2465
        %2483 = vst.msk [vmem:[%s727 + $0x78] sm:$0xff] %vm2467, %v2466
        %s2484 = smul.u32 16, %s37
        %p2485 = scmp.lt.s32.totalorder %s2484, 31
        %s2486 = scalar_select %p2485, %s2484, 31
        %s2487 = smul.addr %s2486, 8
        %s2488 = scalar_lea.vmem %s20, %s2487
        // Predicated region
        $region129: #{tpu_custom_call.1} parent=99 // pred_check
          %p2489 = pneg %p480
        $region130: #{tpu_custom_call.1} parent=99 // pred_check_branch
          %2491 = sbr.rel (%p2489) target = $region132
        $region131: #{tpu_custom_call.1} parent=99 // pred_region
          %s2492 = smul.u32 16, %s37
        $region132: #{tpu_custom_call.1} parent=99 // pred_fallthru
          _
      $region100: #{tpu_custom_call.1} parent=5 // pred_fallthru
        _
      %p2493 = scmp.le.s32.totalorder 2, %s32
      // Predicated region
      $region133: #{tpu_custom_call.1} parent=5 // pred_check
        %p2494 = pneg %p2493
      $region134: #{tpu_custom_call.1} parent=5 // pred_check_branch
        %2496 = sbr.rel (%p2494) target = $region136
      $region135: #{tpu_custom_call.1} parent=5 // pred_region
        %s2497 = ssub.s32 %s32, 2
        // Predicated region
        $region137: #{tpu_custom_call.1} parent=135 // pred_check
          %p2498 = pneg %p486
        $region138: #{tpu_custom_call.1} parent=135 // pred_check_branch
          %2500 = sbr.rel (%p2498) target = $region140
        $region139: #{tpu_custom_call.1} parent=135 // pred_region
          %s2501 = smul.u32 16, %s38
          %p2502 = scmp.lt.s32.totalorder %s2501, 31
          %s2503 = scalar_select %p2502, %s2501, 31
          %s2504 = smul.addr %s2503, 8
          %s2505 = scalar_lea.vmem %s20, %s2504
        $region140: #{tpu_custom_call.1} parent=135 // pred_fallthru
          _
      $region136: #{tpu_custom_call.1} parent=5 // pred_fallthru
        _
    $region6: #{tpu_custom_call.1} parent=1 // loop_footer
      %s36 = sadd.s32 1, %s32
    $region7: #{tpu_custom_call.1} parent=1 // loop_footer_branch
      %31 = sbr.rel target = $region3
    $region8: #{tpu_custom_call.1} parent=1 // loop_exit
      _
    %2506 = vsyncpa [#allocation4], 1
    %s2507 = scalar_lea.sflag [#allocation4], 1
    %2508 = vsyncpa %s2507, 1
    %2509 = vsyncpa [#allocation6], 1
    %2510 = vsyncpa [#allocation9], 1
    %2511 = vsyncpa [#allocation12], 1

</llo_original>
